<compile_context>
chip_gen: v6e
topology: v6e:2x2x1
jax: 0.10.0
libtpu: 0.0.40
codegen_flags: <defaults>
</compile_context>

<pallas_src>
import jax
import jax.numpy as jnp
from jax import lax
from jax.experimental import pallas as pl
from jax.experimental.pallas import tpu as pltpu

NUM_CH_DEC = (16, 32, 64, 128, 256)

# Per-kernel VMEM working-set budget (blocks + scratch).  Keeps every layer
# well inside v7x's 64 MiB physical VMEM, with double-buffering headroom.
_VMEM_BUDGET = 10 * 2**20
# Raise the 32 MiB scoped default; stays under v7x's 64 MiB physical VMEM.
_VMEM_LIMIT = 48 * 2**20


def _sublanes(itemsize):
    return 8 if itemsize >= 4 else 16


# ----------------------------------------------------------------------------
# Block-size selection (VMEM-budgeted row blocks, Cout-aware matmul groups)
# ----------------------------------------------------------------------------
def _vmem_estimate(TH, W, c1, c2, cout, cout_store, itemsize, row_up):
    thx = TH // 2 if row_up else TH
    est = (thx + 2) * W * c1 * itemsize * 2            # x center + halos (x2 bufs)
    est += (TH + 2) * (W + 2) * c1 * itemsize          # padded scratch
    est += TH * W * 9 * c1 * itemsize                  # im2col scratch
    if c2:
        est += (TH + 2) * W * c2 * itemsize * 2
        est += (TH + 2) * (W + 2) * c2 * itemsize
        est += TH * W * 9 * c2 * itemsize
    est += TH * W * cout_store * itemsize * 2          # output block (x2 bufs)
    est += 9 * (c1 + c2) * cout * itemsize * 2 + cout * 8
    return est


def _pick_block_rows(H, W, c1, c2, cout, cout_store, itemsize, row_up,
                     budget=_VMEM_BUDGET):
    """Largest row block TH (divisor of H, even when row_up) within the budget."""
    step = 2 if row_up else 1
    sub = _sublanes(itemsize)
    cands = [d for d in range(step, H + 1, step) if H % d == 0]
    best = cands[0]
    for d in cands:
        if W % sub != 0 and d > 8:
            continue          # bounds the per-row (RG == 1) unrolled loop
        if _vmem_estimate(d, W, c1, c2, cout, cout_store, itemsize,
                          row_up) <= budget:
            best = max(best, d)
    return best


# ----------------------------------------------------------------------------
# Fused reflection-pad [+ row-upsample] [+ skip-concat] 3x3 conv kernel.
# Grid = (N, H // TH); one step computes TH output rows of one image.
# ----------------------------------------------------------------------------
def _make_fused_conv_kernel(TH, W, C1, C2, Cout, activation, row_up,
                            col_double, itemsize):
    has_skip = C2 > 0
    sub = _sublanes(itemsize)

    # Matmul row-group RG: Cout-aware M cap so the (RG*W, Cout) f32 accumulator
    # stays register/VMEM friendly while the DMA block (TH rows) stays large.
    if W % sub != 0:
        RG = 1                      # tiny deep-decoder maps (W = 2 / 4)
    else:
        max_m = max(W, (64 * 1024) // max(Cout, 1))     # M * Cout <= 64K elems
        RG = 1
        for d in range(1, TH + 1):
            if TH % d == 0 and d * W <= max_m:
                RG = d
    n_groups = TH // RG

    def _fill_padded(p_ref, center, top, bot):
        # p_ref: (TH+2, W+2, C) reflection-padded tile.
        p_ref[1:TH + 1, 1:W + 1, :] = center
        p_ref[0:1, 1:W + 1, :] = top
        p_ref[TH + 1:TH + 2, 1:W + 1, :] = bot
        p_ref[:, 0:1, :] = p_ref[:, 2:3, :]              # col -1 -> col 1
        p_ref[:, W + 1:W + 2, :] = p_ref[:, W - 1:W, :]  # col W  -> col W-2

    def _build_im2col(i_ref, p_ref, C):
        # i_ref: (TH, W, 9*C).  Built ONCE per grid step (tap-major lanes) so
        # the matmul windows are plain row slices -- no per-dy lane concats.
        for dy in range(3):
            for dx in range(3):
                t = dy * 3 + dx
                i_ref[:, :, t * C:(t + 1) * C] = p_ref[dy:dy + TH, dx:dx + W, :]

    def kernel(*refs):
        if has_skip:
            (xc, xt, xb, sc, st, sb, wx, ws, b, o, px, ix, ps, isk) = refs
        else:
            (xc, xt, xb, wx, b, o, px, ix) = refs
            sc = st = sb = ws = ps = isk = None

        # ---- padded main-input tile (+ fused nearest-x2 row doubling) --------
        if row_up:
            small = xc[0]                                   # (TH//2, W, C1)
            center = jnp.broadcast_to(
                small[:, None], (TH // 2, 2, W, C1)).reshape(TH, W, C1)
        else:
            center = xc[0]                                  # (TH, W, C1)
        _fill_padded(px, center, xt[0], xb[0])
        _build_im2col(ix, px, C1)

        # ---- skip input (already at full resolution) --------------------------
        if has_skip:
            _fill_padded(ps, sc[0], st[0], sb[0])
            _build_im2col(isk, ps, C2)

        # ---- one K = 9*Cin matmul per input per row group, fused epilogue -----
        def group(r0):
            win = ix[pl.ds(r0, RG)].reshape(RG * W, 9 * C1)
            acc = jnp.dot(win, wx[...], preferred_element_type=jnp.float32)
            if has_skip:
                swin = isk[pl.ds(r0, RG)].reshape(RG * W, 9 * C2)
                acc = acc + jnp.dot(swin, ws[...],
                                    preferred_element_type=jnp.float32)
            acc = acc + b[...]
            if activation == "elu":
                # nn.ELU(alpha=1): exp(min(x,0)) - 1 == expm1(x) for x <= 0 and
                # avoids overflow for large positive pre-activations.
                acc = jnp.where(acc > 0.0, acc,
                                jnp.exp(jnp.minimum(acc, 0.0)) - 1.0)
            elif activation == "sigmoid":
                acc = pl.reciprocal(1.0 + jnp.exp(-acc), approx=True)
            res = acc.reshape(RG, W, Cout).astype(o.dtype)
            if col_double:
                # Nearest-x2 column doubling for free: two lane-offset stores;
                # the caller's reshape to (.., 2*W, Cout) is a free bitcast.
                o[0, pl.ds(r0, RG), :, 0:Cout] = res
                o[0, pl.ds(r0, RG), :, Cout:2 * Cout] = res
            else:
                o[0, pl.ds(r0, RG), :, :] = res

        if n_groups <= 8:
            for g in range(n_groups):
                group(g * RG)
        else:
            def body(g, carry):
                group(g * RG)
                return carry
            lax.fori_loop(0, n_groups, body, 0)

    return kernel


def fused_conv3x3(x, skip, w, b, activation, *, row_upsample=False,
                  col_double_out=False):
    """Reflection-padded 3x3 conv + bias + activation as one Pallas kernel.

    Optionally fuses (a) a nearest-x2 ROW upsample of `x` (rows doubled on the
    fly while the padded tile is built; `x` comes in at half height), (b)
    nearest-x2 COLUMN doubling of the OUTPUT (each result row stored twice at
    lane offsets 0 / Cout; the caller's reshape to (.., 2*W, Cout) is a free
    bitcast), and (c) the channel concat of a skip feature map (weight split
    along K; the concatenated activation never exists in HBM).

    x    : (N, H, W, C1)   -- or (N, H//2, W, C1) when row_upsample=True
    skip : (N, H, W, C2) or None
    w    : (3, 3, C1+C2, Cout) conv weight, laid out (dy, dx, cin, cout)
    b    : (1, Cout)
    """
    N, Hx, W, C1 = x.shape
    H = 2 * Hx if row_upsample else Hx
    C2 = 0 if skip is None else skip.shape[-1]
    Cout = w.shape[-1]
    cout_store = 2 * Cout if col_double_out else Cout
    assert w.shape == (3, 3, C1 + C2, Cout), (w.shape, C1, C2, Cout)
    assert H >= 2 and W >= 2, "reflection padding needs H, W >= 2"
    if skip is not None:
        assert skip.shape == (N, H, W, C2)

    itemsize = jnp.dtype(x.dtype).itemsize
    TH = _pick_block_rows(H, W, C1, C2, Cout, cout_store, itemsize,
                          row_upsample)
    THx = TH // 2 if row_upsample else TH
    R = H // TH

    # Collapse (dy, dx, cin) -> K = 9*Cin host-side and split along K into the
    # main-input and skip parts (fused concat).
    wx = w[:, :, :C1, :].reshape(9 * C1, Cout).astype(x.dtype)

    # Row-halo index maps: boundary reflection is done here, so the kernel only
    # sees a TH-row slab + two 1-row halo blocks and VMEM stays O(TH*W*C).
    if row_upsample:
        def x_top_map(n, r):
            return (n, jnp.where(r == 0, 0, r * THx - 1), 0, 0)

        def x_bot_map(n, r):
            return (n, jnp.where(r == R - 1, Hx - 1, (r + 1) * THx), 0, 0)
    else:
        def x_top_map(n, r):
            return (n, jnp.where(r == 0, 1, r * TH - 1), 0, 0)

        def x_bot_map(n, r):
            return (n, jnp.where(r == R - 1, H - 2, (r + 1) * TH), 0, 0)

    inputs = [x, x, x]
    in_specs = [
        pl.BlockSpec((1, THx, W, C1), lambda n, r: (n, r, 0, 0)),
        pl.BlockSpec((1, 1, W, C1), x_top_map),
        pl.BlockSpec((1, 1, W, C1), x_bot_map),
    ]
    scratch = [pltpu.VMEM((TH + 2, W + 2, C1), x.dtype),
               pltpu.VMEM((TH, W, 9 * C1), x.dtype)]
    if skip is not None:
        def s_top_map(n, r):
            return (n, jnp.where(r == 0, 1, r * TH - 1), 0, 0)

        def s_bot_map(n, r):
            return (n, jnp.where(r == R - 1, H - 2, (r + 1) * TH), 0, 0)

        inputs += [skip, skip, skip]
        in_specs += [
            pl.BlockSpec((1, TH, W, C2), lambda n, r: (n, r, 0, 0)),
            pl.BlockSpec((1, 1, W, C2), s_top_map),
            pl.BlockSpec((1, 1, W, C2), s_bot_map),
        ]
        scratch += [pltpu.VMEM((TH + 2, W + 2, C2), skip.dtype),
                    pltpu.VMEM((TH, W, 9 * C2), skip.dtype)]

    # Weight / bias blocks: constant index maps, so the pipeline fetches them
    # only once.  TODO(synk): pipeline_mode=pl.Buffered(1) would also drop the
    # redundant second weight buffer (~2.3 MiB on the 256-ch layers) on v7x.
    inputs.append(wx)
    in_specs.append(pl.BlockSpec((9 * C1, Cout), lambda n, r: (0, 0)))
    if skip is not None:
        ws = w[:, :, C1:, :].reshape(9 * C2, Cout).astype(skip.dtype)
        inputs.append(ws)
        in_specs.append(pl.BlockSpec((9 * C2, Cout), lambda n, r: (0, 0)))
    inputs.append(b.astype(jnp.float32))
    in_specs.append(pl.BlockSpec((1, Cout), lambda n, r: (0, 0)))

    kernel = _make_fused_conv_kernel(TH, W, C1, C2, Cout, activation,
                                     row_upsample, col_double_out, itemsize)
    return pl.pallas_call(
        kernel,
        out_shape=jax.ShapeDtypeStruct((N, H, W, cout_store), x.dtype),
        grid=(N, H // TH),
        in_specs=in_specs,
        out_specs=pl.BlockSpec((1, TH, W, cout_store),
                               lambda n, r: (n, r, 0, 0)),
        scratch_shapes=scratch,
        compiler_params=pltpu.CompilerParams(
            dimension_semantics=("parallel", "parallel"),
            vmem_limit_bytes=_VMEM_LIMIT),
    )(*inputs)


# ----------------------------------------------------------------------------
# Pure-JAX/XLA reference (same math) for the numerical check.
# ----------------------------------------------------------------------------
def conv3x3_ref(x, w, b, activation):
    Cout = w.shape[-1]
    xp = jnp.pad(x, ((0, 0), (1, 1), (1, 1), (0, 0)), mode="reflect")
    y = jax.lax.conv_general_dilated(
        xp, w, window_strides=(1, 1), padding="VALID",
        dimension_numbers=("NHWC", "HWIO", "NHWC"),
        precision=jax.lax.Precision.HIGHEST)
    y = y + b.reshape(1, 1, 1, Cout)
    if activation == "elu":
        y = jnp.where(y > 0.0, y, jnp.expm1(y))
    elif activation == "sigmoid":
        y = jax.nn.sigmoid(y)
    return y


# ----------------------------------------------------------------------------
# Parameters (same shapes/structure as the PyTorch module, synthetic values).
# ----------------------------------------------------------------------------
def init_loop_decoder_params(key, num_ch_enc, scales=(0, 1, 2, 3),
                             num_output_channels=3, use_skips=True):
    params = {}

    def conv_params(k, cin, cout):
        kw, kb = jax.random.split(k)
        w = jax.random.normal(kw, (3, 3, cin, cout), jnp.float32) / \
            jnp.sqrt(9.0 * cin)
        b = jax.random.normal(kb, (1, cout), jnp.float32) * 0.01
        return w, b

    for i in range(4, -1, -1):
        cin = num_ch_enc[-1] if i == 4 else NUM_CH_DEC[i + 1]
        key, sub = jax.random.split(key)
        params[("upconv", i, 0)] = conv_params(sub, cin, NUM_CH_DEC[i])

        cin = NUM_CH_DEC[i]
        if use_skips and i > 0:
            cin += num_ch_enc[i - 1]
        key, sub = jax.random.split(key)
        params[("upconv", i, 1)] = conv_params(sub, cin, NUM_CH_DEC[i])

    for s in scales:
        key, sub = jax.random.split(key)
        params[("dispconv", s)] = conv_params(sub, NUM_CH_DEC[s],
                                              num_output_channels)
    return params


# ----------------------------------------------------------------------------
# Decoder forward passes (faithful port of LoopDecoder.forward, NHWC)
# ----------------------------------------------------------------------------
def loop_decoder_forward_pallas(input_features, params, scales=(0, 1, 2, 3),
                                use_skips=True, disp_maps=None,
                                act_dtype=jnp.float32):
    feats = [f.astype(act_dtype) for f in input_features]
    outputs = {}
    x = feats[-1]
    for i in range(4, -1, -1):
        w, b = params[("upconv", i, 0)]
        N, Hc, Wc, _ = x.shape
        c0 = w.shape[-1]
        # ConvBlock (Conv3x3 + ELU); emits its output with columns already
        # doubled (half of the nearest-x2 upsample).  The reshape is a free
        # bitcast, so the upsampled tensor never round-trips HBM twice.
        y = fused_conv3x3(x, None, w, b, "elu", col_double_out=True)
        x_half = y.reshape(N, Hc, 2 * Wc, c0)
        skip = feats[i - 1] if (use_skips and i > 0) else None
        w, b = params[("upconv", i, 1)]
        # Second ConvBlock: fused row doubling (other half of the upsample)
        # and fused skip-concat.
        x = fused_conv3x3(x_half, skip, w, b, "elu", row_upsample=True)
        if i in scales:
            xd = x
            if disp_maps is not None:
                # torch: x = torch.mul(x, disp) with channel broadcast
                xd = xd * disp_maps[("disp", i)].astype(x.dtype)
            w, b = params[("dispconv", i)]
            # TODO(synk): fuse the 3-channel dispconv + sigmoid into the
            # preceding kernel (needs one extra output-row halo) and make its
            # Cout=3 store lane-dense; kept as a separate Pallas call for now.
            outputs[("render", i)] = fused_conv3x3(xd, None, w, b, "sigmoid")
    return outputs


def loop_decoder_forward_ref(input_features, params, scales=(0, 1, 2, 3),
                             use_skips=True, disp_maps=None):
    outputs = {}
    x = input_features[-1]
    for i in range(4, -1, -1):
        w, b = params[("upconv", i, 0)]
        x = conv3x3_ref(x, w, b, "elu")
        x = jnp.repeat(jnp.repeat(x, 2, axis=1), 2, axis=2)   # nearest x2
        if use_skips and i > 0:
            x = jnp.concatenate([x, input_features[i - 1]], axis=-1)
        w, b = params[("upconv", i, 1)]
        x = conv3x3_ref(x, w, b, "elu")
        if i in scales:
            xd = x
            if disp_maps is not None:
                xd = xd * disp_maps[("disp", i)]
            w, b = params[("dispconv", i)]
            outputs[("render", i)] = conv3x3_ref(xd, w, b, "sigmoid")
    return outputs


# ----------------------------------------------------------------------------
if __name__ == "__main__":
    key = jax.random.PRNGKey(0)

    # Synthetic encoder pyramid (NHWC): feature i has spatial 32 / 2**i and
    # channel count num_ch_enc[i].
    num_ch_enc = [16, 16, 32, 64, 64]
    spatial = [32, 16, 8, 4, 2]
    N = 2

    input_features = []
    for c, s in zip(num_ch_enc, spatial):
        key, sub = jax.random.split(key)
        input_features.append(jax.random.normal(sub, (N, s, s, c), jnp.float32))

    key, pkey = jax.random.split(key)
    params = init_loop_decoder_params(pkey, num_ch_enc)

    # --- Pallas forward (f32) vs pure-JAX/XLA reference ----------------------
    outs = loop_decoder_forward_pallas(input_features, params)
    outs = jax.tree_util.tree_map(jax.block_until_ready, outs)
    refs = loop_decoder_forward_ref(input_features, params)

    for k in sorted(outs.keys()):
        assert outs[k].shape == refs[k].shape, (k, outs[k].shape, refs[k].shape)
        err = float(jnp.max(jnp.abs(outs[k] - refs[k])))
        assert err < 5e-3, f"f32 mismatch at {k}: max abs err {err}"

    # --- bf16 activations/weights, f32 accumulate (fast path on v5e too) -----
    outs_bf16 = loop_decoder_forward_pallas(input_features, params,
                                            act_dtype=jnp.bfloat16)
    outs_bf16 = jax.tree_util.tree_map(jax.block_until_ready, outs_bf16)
    for k in sorted(outs_bf16.keys()):
        err = float(jnp.max(jnp.abs(outs_bf16[k].astype(jnp.float32) - refs[k])))
        assert err < 1e-1, f"bf16 mismatch at {k}: max abs err {err}"

    print("KERNEL_OK")
</pallas_src>

<mosaic_0001>
module attributes {stable_mosaic.version = 11 : i64} {
  func.func @kernel(%arg0: i32, %arg1: i32, %arg2: memref<1x2x2x64xf32, #tpu.memory_space<vmem>>, %arg3: memref<1x1x2x64xf32, #tpu.memory_space<vmem>>, %arg4: memref<1x1x2x64xf32, #tpu.memory_space<vmem>>, %arg5: memref<576x256xf32, #tpu.memory_space<vmem>>, %arg6: memref<1x256xf32, #tpu.memory_space<vmem>>, %arg7: memref<1x2x2x512xf32, #tpu.memory_space<vmem>>, %arg8: memref<4x4x64xf32, #tpu.memory_space<vmem>>, %arg9: memref<2x2x576xf32, #tpu.memory_space<vmem>>) attributes {dimension_semantics = [#tpu.dimension_semantics<parallel>, #tpu.dimension_semantics<parallel>], iteration_bounds = array<i64: 2, 1>, scalar_prefetch = 0 : i64, scratch_operands = 2 : i64, tpu.core_type = #tpu.core_type<tc>, window_params = [{transform_indices = @transform_0, window_bounds = array<i64: 1, 2, 2, 64>}, {transform_indices = @transform_1, window_bounds = array<i64: 1, 1, 2, 64>}, {transform_indices = @transform_2, window_bounds = array<i64: 1, 1, 2, 64>}, {pipeline_mode = #tpu.pipeline_mode<synchronous>, transform_indices = @transform_3, window_bounds = array<i64: 576, 256>}, {pipeline_mode = #tpu.pipeline_mode<synchronous>, transform_indices = @transform_4, window_bounds = array<i64: 1, 256>}, {transform_indices = @transform_5, window_bounds = array<i64: 1, 2, 2, 512>}]} {
    %c0 = arith.constant 0 : index
    %c0_0 = arith.constant 0 : index
    %c0_1 = arith.constant 0 : index
    %c0_2 = arith.constant 0 : index
    %0 = vector.load %arg2[%c0, %c0_0, %c0_1, %c0_2] : memref<1x2x2x64xf32, #tpu.memory_space<vmem>>, vector<1x2x2x64xf32>
    %1 = vector.shape_cast %0 : vector<1x2x2x64xf32> to vector<2x2x64xf32>
    %c0_3 = arith.constant 0 : index
    %c0_4 = arith.constant 0 : index
    %c0_5 = arith.constant 0 : index
    %c0_6 = arith.constant 0 : index
    %2 = vector.load %arg3[%c0_3, %c0_4, %c0_5, %c0_6] : memref<1x1x2x64xf32, #tpu.memory_space<vmem>>, vector<1x1x2x64xf32>
    %3 = vector.shape_cast %2 : vector<1x1x2x64xf32> to vector<1x2x64xf32>
    %c0_7 = arith.constant 0 : index
    %c0_8 = arith.constant 0 : index
    %c0_9 = arith.constant 0 : index
    %c0_10 = arith.constant 0 : index
    %4 = vector.load %arg4[%c0_7, %c0_8, %c0_9, %c0_10] : memref<1x1x2x64xf32, #tpu.memory_space<vmem>>, vector<1x1x2x64xf32>
    %5 = vector.shape_cast %4 : vector<1x1x2x64xf32> to vector<1x2x64xf32>
    %c1 = arith.constant 1 : index
    %c1_11 = arith.constant 1 : index
    %c0_12 = arith.constant 0 : index
    %6 = vector.load %arg8[%c1, %c1_11, %c0_12] : memref<4x4x64xf32, #tpu.memory_space<vmem>>, vector<2x2x64xf32>
    tpu.vector_store %arg8[%c1, %c1_11, %c0_12], %1 {strides = array<i32>} : memref<4x4x64xf32, #tpu.memory_space<vmem>>, vector<2x2x64xf32>,
    %c0_13 = arith.constant 0 : index
    %c1_14 = arith.constant 1 : index
    %c0_15 = arith.constant 0 : index
    %7 = vector.load %arg8[%c0_13, %c1_14, %c0_15] : memref<4x4x64xf32, #tpu.memory_space<vmem>>, vector<1x2x64xf32>
    tpu.vector_store %arg8[%c0_13, %c1_14, %c0_15], %3 {strides = array<i32>} : memref<4x4x64xf32, #tpu.memory_space<vmem>>, vector<1x2x64xf32>,
    %c3 = arith.constant 3 : index
    %c1_16 = arith.constant 1 : index
    %c0_17 = arith.constant 0 : index
    %8 = vector.load %arg8[%c3, %c1_16, %c0_17] : memref<4x4x64xf32, #tpu.memory_space<vmem>>, vector<1x2x64xf32>
    tpu.vector_store %arg8[%c3, %c1_16, %c0_17], %5 {strides = array<i32>} : memref<4x4x64xf32, #tpu.memory_space<vmem>>, vector<1x2x64xf32>,
    %c0_18 = arith.constant 0 : index
    %c2 = arith.constant 2 : index
    %c0_19 = arith.constant 0 : index
    %9 = vector.load %arg8[%c0_18, %c2, %c0_19] : memref<4x4x64xf32, #tpu.memory_space<vmem>>, vector<4x1x64xf32>
    %c0_20 = arith.constant 0 : index
    %c0_21 = arith.constant 0 : index
    %c0_22 = arith.constant 0 : index
    %10 = vector.load %arg8[%c0_20, %c0_21, %c0_22] : memref<4x4x64xf32, #tpu.memory_space<vmem>>, vector<4x1x64xf32>
    tpu.vector_store %arg8[%c0_20, %c0_21, %c0_22], %9 {strides = array<i32>} : memref<4x4x64xf32, #tpu.memory_space<vmem>>, vector<4x1x64xf32>,
    %c0_23 = arith.constant 0 : index
    %c1_24 = arith.constant 1 : index
    %c0_25 = arith.constant 0 : index
    %11 = vector.load %arg8[%c0_23, %c1_24, %c0_25] : memref<4x4x64xf32, #tpu.memory_space<vmem>>, vector<4x1x64xf32>
    %c0_26 = arith.constant 0 : index
    %c3_27 = arith.constant 3 : index
    %c0_28 = arith.constant 0 : index
    %12 = vector.load %arg8[%c0_26, %c3_27, %c0_28] : memref<4x4x64xf32, #tpu.memory_space<vmem>>, vector<4x1x64xf32>
    tpu.vector_store %arg8[%c0_26, %c3_27, %c0_28], %11 {strides = array<i32>} : memref<4x4x64xf32, #tpu.memory_space<vmem>>, vector<4x1x64xf32>,
    %c0_29 = arith.constant 0 : index
    %c0_30 = arith.constant 0 : index
    %c0_31 = arith.constant 0 : index
    %13 = vector.load %arg8[%c0_29, %c0_30, %c0_31] : memref<4x4x64xf32, #tpu.memory_space<vmem>>, vector<2x2x64xf32>
    %c0_32 = arith.constant 0 : index
    %c0_33 = arith.constant 0 : index
    %c0_34 = arith.constant 0 : index
    %14 = vector.load %arg9[%c0_32, %c0_33, %c0_34] : memref<2x2x576xf32, #tpu.memory_space<vmem>>, vector<2x2x64xf32>
    tpu.vector_store %arg9[%c0_32, %c0_33, %c0_34], %13 {strides = array<i32>} : memref<2x2x576xf32, #tpu.memory_space<vmem>>, vector<2x2x64xf32>,
    %c0_35 = arith.constant 0 : index
    %c1_36 = arith.constant 1 : index
    %c0_37 = arith.constant 0 : index
    %15 = vector.load %arg8[%c0_35, %c1_36, %c0_37] : memref<4x4x64xf32, #tpu.memory_space<vmem>>, vector<2x2x64xf32>
    %c0_38 = arith.constant 0 : index
    %c0_39 = arith.constant 0 : index
    %c64 = arith.constant 64 : index
    %16 = vector.load %arg9[%c0_38, %c0_39, %c64] : memref<2x2x576xf32, #tpu.memory_space<vmem>>, vector<2x2x64xf32>
    tpu.vector_store %arg9[%c0_38, %c0_39, %c64], %15 {strides = array<i32>} : memref<2x2x576xf32, #tpu.memory_space<vmem>>, vector<2x2x64xf32>,
    %c0_40 = arith.constant 0 : index
    %c2_41 = arith.constant 2 : index
    %c0_42 = arith.constant 0 : index
    %17 = vector.load %arg8[%c0_40, %c2_41, %c0_42] : memref<4x4x64xf32, #tpu.memory_space<vmem>>, vector<2x2x64xf32>
    %c0_43 = arith.constant 0 : index
    %c0_44 = arith.constant 0 : index
    %c128 = arith.constant 128 : index
    %18 = vector.load %arg9[%c0_43, %c0_44, %c128] : memref<2x2x576xf32, #tpu.memory_space<vmem>>, vector<2x2x64xf32>
    tpu.vector_store %arg9[%c0_43, %c0_44, %c128], %17 {strides = array<i32>} : memref<2x2x576xf32, #tpu.memory_space<vmem>>, vector<2x2x64xf32>,
    %c1_45 = arith.constant 1 : index
    %c0_46 = arith.constant 0 : index
    %c0_47 = arith.constant 0 : index
    %19 = vector.load %arg8[%c1_45, %c0_46, %c0_47] : memref<4x4x64xf32, #tpu.memory_space<vmem>>, vector<2x2x64xf32>
    %c0_48 = arith.constant 0 : index
    %c0_49 = arith.constant 0 : index
    %c192 = arith.constant 192 : index
    %20 = vector.load %arg9[%c0_48, %c0_49, %c192] : memref<2x2x576xf32, #tpu.memory_space<vmem>>, vector<2x2x64xf32>
    tpu.vector_store %arg9[%c0_48, %c0_49, %c192], %19 {strides = array<i32>} : memref<2x2x576xf32, #tpu.memory_space<vmem>>, vector<2x2x64xf32>,
    %c1_50 = arith.constant 1 : index
    %c1_51 = arith.constant 1 : index
    %c0_52 = arith.constant 0 : index
    %21 = vector.load %arg8[%c1_50, %c1_51, %c0_52] : memref<4x4x64xf32, #tpu.memory_space<vmem>>, vector<2x2x64xf32>
    %c0_53 = arith.constant 0 : index
    %c0_54 = arith.constant 0 : index
    %c256 = arith.constant 256 : index
    %22 = vector.load %arg9[%c0_53, %c0_54, %c256] : memref<2x2x576xf32, #tpu.memory_space<vmem>>, vector<2x2x64xf32>
    tpu.vector_store %arg9[%c0_53, %c0_54, %c256], %21 {strides = array<i32>} : memref<2x2x576xf32, #tpu.memory_space<vmem>>, vector<2x2x64xf32>,
    %c1_55 = arith.constant 1 : index
    %c2_56 = arith.constant 2 : index
    %c0_57 = arith.constant 0 : index
    %23 = vector.load %arg8[%c1_55, %c2_56, %c0_57] : memref<4x4x64xf32, #tpu.memory_space<vmem>>, vector<2x2x64xf32>
    %c0_58 = arith.constant 0 : index
    %c0_59 = arith.constant 0 : index
    %c320 = arith.constant 320 : index
    %24 = vector.load %arg9[%c0_58, %c0_59, %c320] : memref<2x2x576xf32, #tpu.memory_space<vmem>>, vector<2x2x64xf32>
    tpu.vector_store %arg9[%c0_58, %c0_59, %c320], %23 {strides = array<i32>} : memref<2x2x576xf32, #tpu.memory_space<vmem>>, vector<2x2x64xf32>,
    %c2_60 = arith.constant 2 : index
    %c0_61 = arith.constant 0 : index
    %c0_62 = arith.constant 0 : index
    %25 = vector.load %arg8[%c2_60, %c0_61, %c0_62] : memref<4x4x64xf32, #tpu.memory_space<vmem>>, vector<2x2x64xf32>
    %c0_63 = arith.constant 0 : index
    %c0_64 = arith.constant 0 : index
    %c384 = arith.constant 384 : index
    %26 = vector.load %arg9[%c0_63, %c0_64, %c384] : memref<2x2x576xf32, #tpu.memory_space<vmem>>, vector<2x2x64xf32>
    tpu.vector_store %arg9[%c0_63, %c0_64, %c384], %25 {strides = array<i32>} : memref<2x2x576xf32, #tpu.memory_space<vmem>>, vector<2x2x64xf32>,
    %c2_65 = arith.constant 2 : index
    %c1_66 = arith.constant 1 : index
    %c0_67 = arith.constant 0 : index
    %27 = vector.load %arg8[%c2_65, %c1_66, %c0_67] : memref<4x4x64xf32, #tpu.memory_space<vmem>>, vector<2x2x64xf32>
    %c0_68 = arith.constant 0 : index
    %c0_69 = arith.constant 0 : index
    %c448 = arith.constant 448 : index
    %28 = vector.load %arg9[%c0_68, %c0_69, %c448] : memref<2x2x576xf32, #tpu.memory_space<vmem>>, vector<2x2x64xf32>
    tpu.vector_store %arg9[%c0_68, %c0_69, %c448], %27 {strides = array<i32>} : memref<2x2x576xf32, #tpu.memory_space<vmem>>, vector<2x2x64xf32>,
    %c2_70 = arith.constant 2 : index
    %c2_71 = arith.constant 2 : index
    %c0_72 = arith.constant 0 : index
    %29 = vector.load %arg8[%c2_70, %c2_71, %c0_72] : memref<4x4x64xf32, #tpu.memory_space<vmem>>, vector<2x2x64xf32>
    %c0_73 = arith.constant 0 : index
    %c0_74 = arith.constant 0 : index
    %c512 = arith.constant 512 : index
    %30 = vector.load %arg9[%c0_73, %c0_74, %c512] : memref<2x2x576xf32, #tpu.memory_space<vmem>>, vector<2x2x64xf32>
    tpu.vector_store %arg9[%c0_73, %c0_74, %c512], %29 {strides = array<i32>} : memref<2x2x576xf32, #tpu.memory_space<vmem>>, vector<2x2x64xf32>,
    %c0_75 = arith.constant 0 : index
    %c0_76 = arith.constant 0 : index
    %c0_77 = arith.constant 0 : index
    %31 = vector.load %arg9[%c0_75, %c0_76, %c0_77] : memref<2x2x576xf32, #tpu.memory_space<vmem>>, vector<1x2x576xf32>
    %32 = vector.shape_cast %31 : vector<1x2x576xf32> to vector<2x576xf32>
    %c0_78 = arith.constant 0 : index
    %c0_79 = arith.constant 0 : index
    %33 = vector.load %arg5[%c0_78, %c0_79] : memref<576x256xf32, #tpu.memory_space<vmem>>, vector<576x256xf32>
    %cst = arith.constant dense<0.000000e+00> : vector<2x256xf32>
    %34 = tpu.matmul %32, %33, %cst {dimension_numbers = #tpu.dot_dimension_numbers<[1], [0], [0], [1], [0, 0, 1, 1], [], []>} : vector<2x576xf32>, vector<576x256xf32>, vector<2x256xf32> -> vector<2x256xf32>
    %c0_80 = arith.constant 0 : index
    %c0_81 = arith.constant 0 : index
    %35 = vector.load %arg6[%c0_80, %c0_81] : memref<1x256xf32, #tpu.memory_space<vmem>>, vector<1x256xf32>
    %36 = vector.broadcast %35 : vector<1x256xf32> to vector<2x256xf32>
    %37 = arith.addf %34, %36 : vector<2x256xf32>
    %cst_82 = arith.constant 0.000000e+00 : f32
    %38 = vector.broadcast %cst_82 : f32 to vector<2x256xf32>
    %39 = arith.cmpf ogt, %37, %38 : vector<2x256xf32>
    %cst_83 = arith.constant 0.000000e+00 : f32
    %40 = vector.broadcast %cst_83 : f32 to vector<2x256xf32>
    %41 = arith.minimumf %37, %40 : vector<2x256xf32>
    %42 = math.exp %41 : vector<2x256xf32>
    %cst_84 = arith.constant 1.000000e+00 : f32
    %43 = vector.broadcast %cst_84 : f32 to vector<2x256xf32>
    %44 = arith.subf %42, %43 : vector<2x256xf32>
    %45 = arith.select %39, %37, %44 : vector<2x256xi1>, vector<2x256xf32>
    %46 = vector.shape_cast %45 : vector<2x256xf32> to vector<1x2x256xf32>
    %c0_85 = arith.constant 0 : index
    %c0_86 = arith.constant 0 : index
    %c0_87 = arith.constant 0 : index
    %c0_88 = arith.constant 0 : index
    %47 = vector.load %arg7[%c0_85, %c0_86, %c0_87, %c0_88] : memref<1x2x2x512xf32, #tpu.memory_space<vmem>>, vector<1x1x2x256xf32>
    %48 = vector.shape_cast %47 : vector<1x1x2x256xf32> to vector<1x2x256xf32>
    %49 = vector.shape_cast %46 : vector<1x2x256xf32> to vector<1x1x2x256xf32>
    tpu.vector_store %arg7[%c0_85, %c0_86, %c0_87, %c0_88], %49 {strides = array<i32>} : memref<1x2x2x512xf32, #tpu.memory_space<vmem>>, vector<1x1x2x256xf32>,
    %c0_89 = arith.constant 0 : index
    %c0_90 = arith.constant 0 : index
    %c0_91 = arith.constant 0 : index
    %c256_92 = arith.constant 256 : index
    %50 = vector.load %arg7[%c0_89, %c0_90, %c0_91, %c256_92] : memref<1x2x2x512xf32, #tpu.memory_space<vmem>>, vector<1x1x2x256xf32>
    %51 = vector.shape_cast %50 : vector<1x1x2x256xf32> to vector<1x2x256xf32>
    %52 = vector.shape_cast %46 : vector<1x2x256xf32> to vector<1x1x2x256xf32>
    tpu.vector_store %arg7[%c0_89, %c0_90, %c0_91, %c256_92], %52 {strides = array<i32>} : memref<1x2x2x512xf32, #tpu.memory_space<vmem>>, vector<1x1x2x256xf32>,
    %c1_93 = arith.constant 1 : index
    %c0_94 = arith.constant 0 : index
    %c0_95 = arith.constant 0 : index
    %53 = vector.load %arg9[%c1_93, %c0_94, %c0_95] : memref<2x2x576xf32, #tpu.memory_space<vmem>>, vector<1x2x576xf32>
    %54 = vector.shape_cast %53 : vector<1x2x576xf32> to vector<2x576xf32>
    %c0_96 = arith.constant 0 : index
    %c0_97 = arith.constant 0 : index
    %55 = vector.load %arg5[%c0_96, %c0_97] : memref<576x256xf32, #tpu.memory_space<vmem>>, vector<576x256xf32>
    %cst_98 = arith.constant dense<0.000000e+00> : vector<2x256xf32>
    %56 = tpu.matmul %54, %55, %cst_98 {dimension_numbers = #tpu.dot_dimension_numbers<[1], [0], [0], [1], [0, 0, 1, 1], [], []>} : vector<2x576xf32>, vector<576x256xf32>, vector<2x256xf32> -> vector<2x256xf32>
    %c0_99 = arith.constant 0 : index
    %c0_100 = arith.constant 0 : index
    %57 = vector.load %arg6[%c0_99, %c0_100] : memref<1x256xf32, #tpu.memory_space<vmem>>, vector<1x256xf32>
    %58 = vector.broadcast %57 : vector<1x256xf32> to vector<2x256xf32>
    %59 = arith.addf %56, %58 : vector<2x256xf32>
    %cst_101 = arith.constant 0.000000e+00 : f32
    %60 = vector.broadcast %cst_101 : f32 to vector<2x256xf32>
    %61 = arith.cmpf ogt, %59, %60 : vector<2x256xf32>
    %cst_102 = arith.constant 0.000000e+00 : f32
    %62 = vector.broadcast %cst_102 : f32 to vector<2x256xf32>
    %63 = arith.minimumf %59, %62 : vector<2x256xf32>
    %64 = math.exp %63 : vector<2x256xf32>
    %cst_103 = arith.constant 1.000000e+00 : f32
    %65 = vector.broadcast %cst_103 : f32 to vector<2x256xf32>
    %66 = arith.subf %64, %65 : vector<2x256xf32>
    %67 = arith.select %61, %59, %66 : vector<2x256xi1>, vector<2x256xf32>
    %68 = vector.shape_cast %67 : vector<2x256xf32> to vector<1x2x256xf32>
    %c0_104 = arith.constant 0 : index
    %c1_105 = arith.constant 1 : index
    %c0_106 = arith.constant 0 : index
    %c0_107 = arith.constant 0 : index
    %69 = vector.load %arg7[%c0_104, %c1_105, %c0_106, %c0_107] : memref<1x2x2x512xf32, #tpu.memory_space<vmem>>, vector<1x1x2x256xf32>
    %70 = vector.shape_cast %69 : vector<1x1x2x256xf32> to vector<1x2x256xf32>
    %71 = vector.shape_cast %68 : vector<1x2x256xf32> to vector<1x1x2x256xf32>
    tpu.vector_store %arg7[%c0_104, %c1_105, %c0_106, %c0_107], %71 {strides = array<i32>} : memref<1x2x2x512xf32, #tpu.memory_space<vmem>>, vector<1x1x2x256xf32>,
    %c0_108 = arith.constant 0 : index
    %c1_109 = arith.constant 1 : index
    %c0_110 = arith.constant 0 : index
    %c256_111 = arith.constant 256 : index
    %72 = vector.load %arg7[%c0_108, %c1_109, %c0_110, %c256_111] : memref<1x2x2x512xf32, #tpu.memory_space<vmem>>, vector<1x1x2x256xf32>
    %73 = vector.shape_cast %72 : vector<1x1x2x256xf32> to vector<1x2x256xf32>
    %74 = vector.shape_cast %68 : vector<1x2x256xf32> to vector<1x1x2x256xf32>
    tpu.vector_store %arg7[%c0_108, %c1_109, %c0_110, %c256_111], %74 {strides = array<i32>} : memref<1x2x2x512xf32, #tpu.memory_space<vmem>>, vector<1x1x2x256xf32>,
    return
  }
  func.func @transform_0(%arg0: i32, %arg1: i32) -> (i32, i32, i32, i32) {
    %c0_i32 = arith.constant 0 : i32
    %c0_i32_0 = arith.constant 0 : i32
    %c0_i32_1 = arith.constant 0 : i32
    return %arg0, %arg1, %c0_i32, %c0_i32_0 : i32, i32, i32, i32
  }
  func.func @transform_1(%arg0: i32, %arg1: i32) -> (i32, i32, i32, i32) {
    %c0_i32 = arith.constant 0 : i32
    %0 = arith.cmpi eq, %arg1, %c0_i32 : i32
    %c2_i32 = arith.constant 2 : i32
    %1 = arith.muli %arg1, %c2_i32 : i32
    %c1_i32 = arith.constant 1 : i32
    %2 = arith.subi %1, %c1_i32 : i32
    %c1_i32_0 = arith.constant 1 : i32
    %3 = arith.select %0, %c1_i32_0, %2 : i32
    %c0_i32_1 = arith.constant 0 : i32
    %c0_i32_2 = arith.constant 0 : i32
    %c0_i32_3 = arith.constant 0 : i32
    return %arg0, %3, %c0_i32_1, %c0_i32_2 : i32, i32, i32, i32
  }
  func.func @transform_2(%arg0: i32, %arg1: i32) -> (i32, i32, i32, i32) {
    %c0_i32 = arith.constant 0 : i32
    %0 = arith.cmpi eq, %arg1, %c0_i32 : i32
    %c1_i32 = arith.constant 1 : i32
    %1 = arith.addi %arg1, %c1_i32 : i32
    %c2_i32 = arith.constant 2 : i32
    %2 = arith.muli %1, %c2_i32 : i32
    %c0_i32_0 = arith.constant 0 : i32
    %3 = arith.select %0, %c0_i32_0, %2 : i32
    %c0_i32_1 = arith.constant 0 : i32
    %c0_i32_2 = arith.constant 0 : i32
    %c0_i32_3 = arith.constant 0 : i32
    return %arg0, %3, %c0_i32_1, %c0_i32_2 : i32, i32, i32, i32
  }
  func.func @transform_3(%arg0: i32, %arg1: i32) -> (i32, i32) {
    %c0_i32 = arith.constant 0 : i32
    %c0_i32_0 = arith.constant 0 : i32
    %c0_i32_1 = arith.constant 0 : i32
    return %c0_i32, %c0_i32_0 : i32, i32
  }
  func.func @transform_4(%arg0: i32, %arg1: i32) -> (i32, i32) {
    %c0_i32 = arith.constant 0 : i32
    %c0_i32_0 = arith.constant 0 : i32
    %c0_i32_1 = arith.constant 0 : i32
    return %c0_i32, %c0_i32_0 : i32, i32
  }
  func.func @transform_5(%arg0: i32, %arg1: i32) -> (i32, i32, i32, i32) {
    %c0_i32 = arith.constant 0 : i32
    %c0_i32_0 = arith.constant 0 : i32
    %c0_i32_1 = arith.constant 0 : i32
    return %arg0, %arg1, %c0_i32, %c0_i32_0 : i32, i32, i32, i32
  }
}

</mosaic_0001>

<llo_original>
// kernel: tpu_custom_call.1
$region0: #{tpu_custom_call.1}
  #allocation0 [shape = 'u32[]', space=smem, size = 0x4, offset = 0x4, fixed_abs, tag = 'smem constant byte address 0x4 - core index']
  #allocation1 [shape = 'u32[144,128]{1,0:T(1,128)}', space=vmem, size = 0x12000, scoped, tag = 'internal scratch']
  #allocation2 [shape = 'f32[4,4,64]{2,1,0:T(4,128)}', space=vmem, size = 0x2000, scoped, tag = 'scratch operand']
  #allocation3 [shape = 'f32[2,2,576]{2,1,0:T(2,128)}', space=vmem, size = 0x2800, scoped, tag = 'scratch operand']
  %s0 = inlined_call_operand.hbm [shape: f32[2,2,2,64], index: 0, kind: input, shape index: {}]
  %s1 = inlined_call_operand.hbm [shape: f32[2,2,2,64], index: 1, kind: input, shape index: {}]
  %s2 = inlined_call_operand.hbm [shape: f32[2,2,2,64], index: 2, kind: input, shape index: {}]
  %s3 = inlined_call_operand.hbm [shape: f32[576,256], index: 3, kind: input, shape index: {}]
  %s4 = inlined_call_operand.vmem [shape: f32[1,256], index: 4, kind: input, shape index: {}]
  %s5 = inlined_call_operand.hbm [shape: f32[2,2,2,512], index: 5, kind: output, shape index: {}]
  %s6 = sld [smem:[#allocation0]]
  $region69: #{tpu_custom_call.1} parent=0
    _
  %s8 = ssub.s32 1, %s6
  %s9 = scalar_select 0, %s8, %s6
  $region1: #{tpu_custom_call.1} parent=0
    #allocation4 [shape = 'u8[4096]{0}', space=vmem, size = 0x1000, scoped, tag = 'input window, operand 0']
    #allocation5 [shape = 's32[2]{0}', space=sflag, size = 0x8, scoped, tag = 'scoped memory for tpu_custom_call.1']
    #allocation6 [shape = 's32[2]{0}', space=sflag, size = 0x8, scoped, tag = 'scoped memory for tpu_custom_call.1']
    #allocation7 [shape = 'u8[2048]{0}', space=vmem, size = 0x800, scoped, tag = 'input window, operand 1']
    #allocation8 [shape = 's32[2]{0}', space=sflag, size = 0x8, scoped, tag = 'scoped memory for tpu_custom_call.1']
    #allocation9 [shape = 'u8[2048]{0}', space=vmem, size = 0x800, scoped, tag = 'input window, operand 2']
    #allocation10 [shape = 'u8[589824]{0}', space=vmem, size = 0x90000, scoped, tag = 'input window, operand 3, single buffered']
    #allocation11 [shape = 's32[1]{0}', space=sflag, size = 0x4, scoped, tag = 'scoped memory for tpu_custom_call.1']
    #allocation12 [shape = 'u8[16384]{0}', space=vmem, size = 0x4000, scoped, tag = 'output window, operand 0']
    %10 = vsyncpa [#allocation5], 0
    %s11 = scalar_lea.sflag [#allocation5], 1
    %12 = vsyncpa %s11, 0
    %13 = vsyncpa [#allocation8], 0
    %s14 = scalar_lea.sflag [#allocation8], 1
    %15 = vsyncpa %s14, 0
    %16 = vsyncpa [#allocation11], 0
    %17 = vsyncpa [#allocation6], 0
    %s18 = scalar_lea.sflag [#allocation6], 1
    %19 = vsyncpa %s18, 0
    loop: start=0, step=1, limit=4
    $region2: #{tpu_custom_call.1} parent=1 // loop_pre_header
      _
    $region3: #{tpu_custom_call.1} parent=1 // loop_header
      %s21 = sphi 0, %s25
      %p22 = scmp.ge.s32.totalorder %s21, 4
      %s28 = sphi 0, %s40
      %s29 = sphi 0, %s36
      %s30 = sphi 0, %s28
      %s31 = sphi 0, %s29
      %s32 = sphi 0, %s30
      %s33 = sphi 0, %s31
      %s45 = sphi 0, %s47
      %s48 = sphi 0, %s45
      %s49 = sphi 0, %s48
      %s65 = sphi 0, %s49
      %s81 = sphi 0, %s83
      %s84 = sphi 0, %s81
      %s85 = sphi 0, %s84
      %s101 = sphi 0, %s85
      %s117 = sphi 0, %s119
      %s120 = sphi 0, %s117
      %s121 = sphi 0, %s120
      %s137 = sphi 0, %s121
      %s141 = sphi 0, %s141
      %s143 = sphi 0, %s141
      %s144 = sphi 0, %s143
      %s158 = sphi 0, %s144
      %s162 = sphi 0, %s162
      %s164 = sphi 0, %s162
      %s165 = sphi 0, %s164
      %s179 = sphi 0, %s165
      %s187 = sphi 0, %s189
      %s190 = sphi 0, %s187
      %s191 = sphi 0, %s190
      %s207 = sphi 0, %s191
    $region4: #{tpu_custom_call.1} parent=1 // loop_header_branch
      %24 = sbr.rel (%p22) target = $region8
    $region5: #{tpu_custom_call.1} parent=1 // loop_body
      %s26 = ssub.s32 %s21, 1
      %s27 = ssub.s32 %s21, 2
      %s34 = sadd.s32 1, %s29
      %p35 = scmp.ge.s32.totalorder %s34, 1
      %s36 = scalar_select %p35, 0, %s34
      %s37 = sadd.s32 1, %s28
      %s38 = scalar_select %p35, %s37, %s28
      %p39 = scmp.ge.s32.totalorder %s38, 2
      %s40 = scalar_select %p39, 0, %s38
      %s41 = ssub.s32 %s28, %s40
      %s42 = ssub.s32 %s29, %s36
      %s43 = sor.u32 %s41, %s42
      %p44 = scmp.eq.s32.totalorder %s43, 0
      %s46 = sadd.s32 %s45, 1
      %s47 = scalar_select %p44, %s45, %s46
      %p50 = pneg %p44
      %p51 = scmp.eq.s32.totalorder %s21, 1
      %p52 = por %p50, %p51
      %p53 = scmp.ne.s32.totalorder %s45, %s48
      %p54 = scmp.eq.s32.totalorder %s21, 0
      %p55 = por %p53, %p54
      %p56 = scmp.ne.s32.totalorder %s45, %s48
      %p57 = scmp.eq.s32.totalorder %s26, 1
      %p58 = por %p56, %p57
      %p59 = scmp.ne.s32.totalorder %s48, %s49
      %p60 = scmp.eq.s32.totalorder %s26, 0
      %p61 = por %p59, %p60
      %p62 = scmp.ne.s32.totalorder %s48, %s49
      %p63 = scmp.eq.s32.totalorder %s27, 1
      %p64 = por %p62, %p63
      %p66 = scmp.ne.s32.totalorder %s49, %s65
      %p67 = scmp.eq.s32.totalorder %s27, 0
      %p68 = por %p66, %p67
      %p69 = scmp.eq.s32.totalorder %s29, 0
      %s70 = smul.u32 %s29, 2
      %s71 = ssub.s32 %s70, 1
      %s72 = scalar_select %p69, 1, %s71
      %p73 = scmp.eq.s32.totalorder %s36, 0
      %s74 = smul.u32 %s36, 2
      %s75 = ssub.s32 %s74, 1
      %s76 = scalar_select %p73, 1, %s75
      %s77 = ssub.s32 %s28, %s40
      %s78 = ssub.s32 %s72, %s76
      %s79 = sor.u32 %s77, %s78
      %p80 = scmp.eq.s32.totalorder %s79, 0
      %s82 = sadd.s32 %s81, 1
      %s83 = scalar_select %p80, %s81, %s82
      %p86 = pneg %p80
      %p87 = scmp.eq.s32.totalorder %s21, 1
      %p88 = por %p86, %p87
      %p89 = scmp.ne.s32.totalorder %s81, %s84
      %p90 = scmp.eq.s32.totalorder %s21, 0
      %p91 = por %p89, %p90
      %p92 = scmp.ne.s32.totalorder %s81, %s84
      %p93 = scmp.eq.s32.totalorder %s26, 1
      %p94 = por %p92, %p93
      %p95 = scmp.ne.s32.totalorder %s84, %s85
      %p96 = scmp.eq.s32.totalorder %s26, 0
      %p97 = por %p95, %p96
      %p98 = scmp.ne.s32.totalorder %s84, %s85
      %p99 = scmp.eq.s32.totalorder %s27, 1
      %p100 = por %p98, %p99
      %p102 = scmp.ne.s32.totalorder %s85, %s101
      %p103 = scmp.eq.s32.totalorder %s27, 0
      %p104 = por %p102, %p103
      %p105 = scmp.eq.s32.totalorder %s29, 0
      %s106 = sadd.s32 %s29, 1
      %s107 = smul.u32 %s106, 2
      %s108 = scalar_select %p105, 0, %s107
      %p109 = scmp.eq.s32.totalorder %s36, 0
      %s110 = sadd.s32 %s36, 1
      %s111 = smul.u32 %s110, 2
      %s112 = scalar_select %p109, 0, %s111
      %s113 = ssub.s32 %s28, %s40
      %s114 = ssub.s32 %s108, %s112
      %s115 = sor.u32 %s113, %s114
      %p116 = scmp.eq.s32.totalorder %s115, 0
      %s118 = sadd.s32 %s117, 1
      %s119 = scalar_select %p116, %s117, %s118
      %p122 = pneg %p116
      %p123 = scmp.eq.s32.totalorder %s21, 1
      %p124 = por %p122, %p123
      %p125 = scmp.ne.s32.totalorder %s117, %s120
      %p126 = scmp.eq.s32.totalorder %s21, 0
      %p127 = por %p125, %p126
      %p128 = scmp.ne.s32.totalorder %s117, %s120
      %p129 = scmp.eq.s32.totalorder %s26, 1
      %p130 = por %p128, %p129
      %p131 = scmp.ne.s32.totalorder %s120, %s121
      %p132 = scmp.eq.s32.totalorder %s26, 0
      %p133 = por %p131, %p132
      %p134 = scmp.ne.s32.totalorder %s120, %s121
      %p135 = scmp.eq.s32.totalorder %s27, 1
      %p136 = por %p134, %p135
      %p138 = scmp.ne.s32.totalorder %s121, %s137
      %p139 = scmp.eq.s32.totalorder %s27, 0
      %p140 = por %p138, %p139
      %s142 = sadd.s32 %s141, 1
      %p145 = scmp.eq.s32.totalorder %s21, 1
      %p146 = scmp.ne.s32.totalorder %s141, %s143
      %p147 = scmp.eq.s32.totalorder %s21, 0
      %p148 = por %p146, %p147
      %p149 = scmp.ne.s32.totalorder %s141, %s143
      %p150 = scmp.eq.s32.totalorder %s26, 1
      %p151 = por %p149, %p150
      %p152 = scmp.ne.s32.totalorder %s143, %s144
      %p153 = scmp.eq.s32.totalorder %s26, 0
      %p154 = por %p152, %p153
      %p155 = scmp.ne.s32.totalorder %s143, %s144
      %p156 = scmp.eq.s32.totalorder %s27, 1
      %p157 = por %p155, %p156
      %p159 = scmp.ne.s32.totalorder %s144, %s158
      %p160 = scmp.eq.s32.totalorder %s27, 0
      %p161 = por %p159, %p160
      %s163 = sadd.s32 %s162, 1
      %p166 = scmp.eq.s32.totalorder %s21, 1
      %p167 = scmp.ne.s32.totalorder %s162, %s164
      %p168 = scmp.eq.s32.totalorder %s21, 0
      %p169 = por %p167, %p168
      %p170 = scmp.ne.s32.totalorder %s162, %s164
      %p171 = scmp.eq.s32.totalorder %s26, 1
      %p172 = por %p170, %p171
      %p173 = scmp.ne.s32.totalorder %s164, %s165
      %p174 = scmp.eq.s32.totalorder %s26, 0
      %p175 = por %p173, %p174
      %p176 = scmp.ne.s32.totalorder %s164, %s165
      %p177 = scmp.eq.s32.totalorder %s27, 1
      %p178 = por %p176, %p177
      %p180 = scmp.ne.s32.totalorder %s165, %s179
      %p181 = scmp.eq.s32.totalorder %s27, 0
      %p182 = por %p180, %p181
      %s183 = ssub.s32 %s28, %s40
      %s184 = ssub.s32 %s29, %s36
      %s185 = sor.u32 %s183, %s184
      %p186 = scmp.eq.s32.totalorder %s185, 0
      %s188 = sadd.s32 %s187, 1
      %s189 = scalar_select %p186, %s187, %s188
      %p192 = pneg %p186
      %p193 = scmp.eq.s32.totalorder %s21, 1
      %p194 = por %p192, %p193
      %p195 = scmp.ne.s32.totalorder %s187, %s190
      %p196 = scmp.eq.s32.totalorder %s21, 0
      %p197 = por %p195, %p196
      %p198 = scmp.ne.s32.totalorder %s187, %s190
      %p199 = scmp.eq.s32.totalorder %s26, 1
      %p200 = por %p198, %p199
      %p201 = scmp.ne.s32.totalorder %s190, %s191
      %p202 = scmp.eq.s32.totalorder %s26, 0
      %p203 = por %p201, %p202
      %p204 = scmp.ne.s32.totalorder %s190, %s191
      %p205 = scmp.eq.s32.totalorder %s27, 1
      %p206 = por %p204, %p205
      %p208 = scmp.ne.s32.totalorder %s191, %s207
      %p209 = scmp.eq.s32.totalorder %s27, 0
      %p210 = por %p208, %p209
      %p211 = scmp.le.s32.totalorder 1, %s21
      %p212 = scmp.lt.s32.totalorder %s21, 3
      %p213 = pnand %p211, %p212
      %p214 = pneg %p213
      // Predicated region
      $region9: #{tpu_custom_call.1} parent=5 // pred_check
        _
      $region10: #{tpu_custom_call.1} parent=5 // pred_check_branch
        %216 = sbr.rel (%p213) target = $region12
      $region11: #{tpu_custom_call.1} parent=5 // pred_region
        %s217 = ssub.s32 %s21, 1
        // Predicated region
        $region13: #{tpu_custom_call.1} parent=11 // pred_check
          %p218 = pneg %p154
        $region14: #{tpu_custom_call.1} parent=11 // pred_check_branch
          %220 = sbr.rel (%p218) target = $region16
        $region15: #{tpu_custom_call.1} parent=11 // pred_region
          %s222 = ssub.s32 18432, 18432
          %223 = vsyncadd [#allocation11], %s222
          %s224 = sshll.u32 [#allocation10], 4
          %s225 = int_to_ptr.vmem [resolvable:$true] %s224
          %230 = dma.hbm_to_vmem [thread:$0]  %s3, 18432, %s225, [#allocation11], 256, 256, 16
        $region16: #{tpu_custom_call.1} parent=11 // pred_fallthru
          _
        // Predicated region
        $region17: #{tpu_custom_call.1} parent=11 // pred_check
          %p231 = pneg %p175
        $region18: #{tpu_custom_call.1} parent=11 // pred_check_branch
          %233 = sbr.rel (%p231) target = $region20
        $region19: #{tpu_custom_call.1} parent=11 // pred_region
          _
        $region20: #{tpu_custom_call.1} parent=11 // pred_fallthru
          _
      $region12: #{tpu_custom_call.1} parent=5 // pred_fallthru
        _
      %p234 = scmp.lt.s32.totalorder %s21, 2
      // Predicated region
      $region21: #{tpu_custom_call.1} parent=5 // pred_check
        %p235 = pneg %p234
      $region22: #{tpu_custom_call.1} parent=5 // pred_check_branch
        %237 = sbr.rel (%p235) target = $region24
      $region23: #{tpu_custom_call.1} parent=5 // pred_region
        // Predicated region
        $region25: #{tpu_custom_call.1} parent=23 // pred_check
          %p238 = pneg %p55
        $region26: #{tpu_custom_call.1} parent=23 // pred_check_branch
          %240 = sbr.rel (%p238) target = $region28
        $region27: #{tpu_custom_call.1} parent=23 // pred_region
          %s241 = sand.u32 %s45, 1
          %s242 = scalar_lea.sflag [#allocation5], %s241
          %s243 = sand.u32 %s45, 1
          %s244 = smul.addr %s243, 4
          %s245 = scalar_lea.vmem [#allocation4], %s244
          %s246 = smul.u32 2, %s29
          %s248 = ssub.s32 64, 64
          %249 = vsyncadd %s242, %s248
          %s250 = smul.addr %s28, 2
          %s251 = sadd.s32 %s246, %s250
          %s252 = smul.addr %s251, 32
          %s253 = scalar_lea.hbm %s0, %s252
          %s254 = sshll.u32 %s245, 4
          %s255 = int_to_ptr.vmem [resolvable:$true] %s254
          %260 = dma.hbm_to_vmem [thread:$0]  %s253, 64, %s255, %s242, 32, 32, 2
        $region28: #{tpu_custom_call.1} parent=23 // pred_fallthru
          _
        // Predicated region
        $region29: #{tpu_custom_call.1} parent=23 // pred_check
          %p261 = pneg %p91
        $region30: #{tpu_custom_call.1} parent=23 // pred_check_branch
          %263 = sbr.rel (%p261) target = $region32
        $region31: #{tpu_custom_call.1} parent=23 // pred_region
          %s264 = sand.u32 %s21, 1
          %s265 = scalar_lea.sflag [#allocation8], %s264
          %s266 = sand.u32 %s81, 1
          %s267 = smul.addr %s266, 2
          %s268 = scalar_lea.vmem [#allocation7], %s267
          %p269 = scmp.eq.s32.totalorder %s29, 0
          %s270 = smul.u32 %s29, 2
          %s271 = ssub.s32 %s270, 1
          %s272 = scalar_select %p269, 1, %s271
          %s274 = ssub.s32 32, 32
          %275 = vsyncadd %s265, %s274
          %s276 = smul.addr %s28, 2
          %s277 = sadd.s32 %s272, %s276
          %s278 = smul.addr %s277, 32
          %s279 = scalar_lea.hbm %s1, %s278
          %s281 = sshll.u32 %s268, 4
          %s282 = int_to_ptr.vmem [resolvable:$true] %s281
          %284 = dma.hbm_to_vmem [thread:$0]  %s279, 32, %s282, %s265
        $region32: #{tpu_custom_call.1} parent=23 // pred_fallthru
          _
        // Predicated region
        $region33: #{tpu_custom_call.1} parent=23 // pred_check
          %p285 = pneg %p127
        $region34: #{tpu_custom_call.1} parent=23 // pred_check_branch
          %287 = sbr.rel (%p285) target = $region36
        $region35: #{tpu_custom_call.1} parent=23 // pred_region
          %s288 = sand.u32 %s21, 1
          %s289 = scalar_lea.sflag [#allocation8], %s288
          %s290 = sand.u32 %s117, 1
          %s291 = smul.addr %s290, 2
          %s292 = scalar_lea.vmem [#allocation9], %s291
          %p293 = scmp.eq.s32.totalorder %s29, 0
          %s294 = sadd.s32 %s29, 1
          %s295 = smul.u32 %s294, 2
          %s296 = scalar_select %p293, 0, %s295
          %s298 = ssub.s32 32, 32
          %299 = vsyncadd %s289, %s298
          %s300 = smul.addr %s28, 2
          %s301 = sadd.s32 %s296, %s300
          %s302 = smul.addr %s301, 32
          %s303 = scalar_lea.hbm %s2, %s302
          %s305 = sshll.u32 %s292, 4
          %s306 = int_to_ptr.vmem [resolvable:$true] %s305
          %308 = dma.hbm_to_vmem [thread:$0]  %s303, 32, %s306, %s289
        $region36: #{tpu_custom_call.1} parent=23 // pred_fallthru
          _
      $region24: #{tpu_custom_call.1} parent=5 // pred_fallthru
        _
      %p309 = scmp.le.s32.totalorder 1, %s21
      %p310 = scmp.lt.s32.totalorder %s21, 3
      %p311 = pnand %p309, %p310
      %p312 = pneg %p311
      // Predicated region
      $region37: #{tpu_custom_call.1} parent=5 // pred_check
        _
      $region38: #{tpu_custom_call.1} parent=5 // pred_check_branch
        %314 = sbr.rel (%p311) target = $region40
      $region39: #{tpu_custom_call.1} parent=5 // pred_region
        %s315 = ssub.s32 %s21, 1
        %s316 = sand.u32 %s48, 1
        %s317 = scalar_lea.sflag [#allocation5], %s316
        %s318 = sand.u32 %s48, 1
        %s319 = smul.addr %s318, 4
        %s320 = scalar_lea.vmem [#allocation4], %s319
        // Predicated region
        $region41: #{tpu_custom_call.1} parent=39 // pred_check
          %p321 = pneg %p61
        $region42: #{tpu_custom_call.1} parent=39 // pred_check_branch
          %323 = sbr.rel (%p321) target = $region44
        $region43: #{tpu_custom_call.1} parent=39 // pred_region
          %324 = dma.done %s317, 64
        $region44: #{tpu_custom_call.1} parent=39 // pred_fallthru
          _
        %s325 = sand.u32 %s26, 1
        %s326 = scalar_lea.sflag [#allocation8], %s325
        %s327 = sand.u32 %s84, 1
        %s328 = smul.addr %s327, 2
        %s329 = scalar_lea.vmem [#allocation7], %s328
        // Predicated region
        $region45: #{tpu_custom_call.1} parent=39 // pred_check
          %p330 = pneg %p97
        $region46: #{tpu_custom_call.1} parent=39 // pred_check_branch
          %332 = sbr.rel (%p330) target = $region48
        $region47: #{tpu_custom_call.1} parent=39 // pred_region
          %333 = dma.done %s326, 32
        $region48: #{tpu_custom_call.1} parent=39 // pred_fallthru
          _
        %s334 = sand.u32 %s26, 1
        %s335 = scalar_lea.sflag [#allocation8], %s334
        %s336 = sand.u32 %s120, 1
        %s337 = smul.addr %s336, 2
        %s338 = scalar_lea.vmem [#allocation9], %s337
        // Predicated region
        $region49: #{tpu_custom_call.1} parent=39 // pred_check
          %p339 = pneg %p133
        $region50: #{tpu_custom_call.1} parent=39 // pred_check_branch
          %341 = sbr.rel (%p339) target = $region52
        $region51: #{tpu_custom_call.1} parent=39 // pred_region
          %342 = dma.done %s335, 32
        $region52: #{tpu_custom_call.1} parent=39 // pred_fallthru
          _
        // Predicated region
        $region53: #{tpu_custom_call.1} parent=39 // pred_check
          %p343 = pneg %p154
        $region54: #{tpu_custom_call.1} parent=39 // pred_check_branch
          %345 = sbr.rel (%p343) target = $region56
        $region55: #{tpu_custom_call.1} parent=39 // pred_region
          %346 = dma.done [#allocation11], 18432
        $region56: #{tpu_custom_call.1} parent=39 // pred_fallthru
          _
        %s347 = sand.u32 %s48, 1
        %s348 = scalar_lea.sflag [#allocation5], %s347
        %s349 = sand.u32 %s48, 1
        %s350 = smul.addr %s349, 4
        %s351 = scalar_lea.vmem [#allocation4], %s350
        %p352 = pneg %p61
        %p353 = pneg %p58
        %s354 = sand.u32 %s26, 1
        %s355 = scalar_lea.sflag [#allocation8], %s354
        %s356 = sand.u32 %s84, 1
        %s357 = smul.addr %s356, 2
        %s358 = scalar_lea.vmem [#allocation7], %s357
        %p359 = pneg %p97
        %p360 = pneg %p94
        %s361 = sand.u32 %s26, 1
        %s362 = scalar_lea.sflag [#allocation8], %s361
        %s363 = sand.u32 %s120, 1
        %s364 = smul.addr %s363, 2
        %s365 = scalar_lea.vmem [#allocation9], %s364
        %p366 = pneg %p133
        %p367 = pneg %p130
        %p368 = pneg %p154
        %p369 = pneg %p151
        %p370 = pneg %p175
        %p371 = pneg %p172
        %p372 = pneg %p203
        %p373 = pneg %p200
        %s374 = sand.u32 %s190, 1
        %s375 = scalar_lea.sflag [#allocation6], %s374
        %s376 = sand.u32 %s190, 1
        %s377 = smul.addr %s376, 16
        %s378 = scalar_lea.vmem [#allocation12], %s377
        %s379 = smul.u32 2, %s31
        %p380 = scmp.eq.s32.totalorder %s31, 0
        %s381 = smul.u32 %s31, 2
        %s382 = ssub.s32 %s381, 1
        %s383 = scalar_select %p380, 1, %s382
        %p384 = scmp.eq.s32.totalorder %s31, 0
        %s385 = sadd.s32 %s31, 1
        %s386 = smul.u32 %s385, 2
        %s387 = scalar_select %p384, 0, %s386
        %s388 = smul.u32 2, %s31
        %v389 = vld [vmem:[%s320] sm:$0x3]
        %v390 = vld [vmem:[%s320 + $0x2] sm:$0x3]
        %v391 = vld [vmem:[%s329] sm:$0x3]
        %v392 = vld [vmem:[%s338] sm:$0x3]
        %s393 = scalar_lea.vmem [#allocation2], 4
        %vm394 = vcmask 517120
        %395 = vst.msk [vmem:[%s393 + $0x1] sm:$0x3] %vm394, %v389
        %396 = vst.msk [vmem:[%s393 + $0x5] sm:$0x3] %vm394, %v390
        %397 = vst.msk [vmem:[#allocation2 + $0x1] sm:$0x3] %vm394, %v391
        %s398 = scalar_lea.vmem [#allocation2], 12
        %399 = vst.msk [vmem:[%s398 + $0x1] sm:$0x3] %vm394, %v392
        %v400 = vld [vmem:[#allocation2 + $0x2] sm:$0x1]
        %v401 = vld [vmem:[#allocation2 + $0x6] sm:$0x1]
        %v402 = vld [vmem:[#allocation2 + $0xa] sm:$0x1]
        %v403 = vld [vmem:[#allocation2 + $0xe] sm:$0x1]
        %vm404 = vcmask 516096
        %405 = vst.msk [vmem:[#allocation2] sm:$0x1] %vm404, %v400
        %406 = vst.msk [vmem:[#allocation2 + $0x4] sm:$0x1] %vm404, %v401
        %407 = vst.msk [vmem:[#allocation2 + $0x8] sm:$0x1] %vm404, %v402
        %408 = vst.msk [vmem:[#allocation2 + $0xc] sm:$0x1] %vm404, %v403
        %v409 = vld [vmem:[#allocation2 + $0x1] sm:$0x1]
        %v410 = vld [vmem:[#allocation2 + $0x5] sm:$0x1]
        %v411 = vld [vmem:[#allocation2 + $0x9] sm:$0x1]
        %v412 = vld [vmem:[#allocation2 + $0xd] sm:$0x1]
        %413 = vst.msk [vmem:[#allocation2 + $0x3] sm:$0x1] %vm404, %v409
        %414 = vst.msk [vmem:[#allocation2 + $0x7] sm:$0x1] %vm404, %v410
        %415 = vst.msk [vmem:[#allocation2 + $0xb] sm:$0x1] %vm404, %v411
        %416 = vst.msk [vmem:[#allocation2 + $0xf] sm:$0x1] %vm404, %v412
        %v417 = vld [vmem:[#allocation2] sm:$0x3]
        %v418 = vld [vmem:[#allocation2 + $0x4] sm:$0x3]
        %419 = vst.msk [vmem:[#allocation3] sm:$0x3] %vm394, %v417
        %420 = vst.msk [vmem:[#allocation3 + $0xa] sm:$0x3] %vm394, %v418
        %v421 = vld [vmem:[#allocation2 + $0x1] sm:$0x3]
        %v422 = vld [vmem:[#allocation2 + $0x5] sm:$0x3]
        %v426 = vunpack.c.l.s4 1983009808
        %v427 = vunpack.c.0.s8 %v426
        %v428 = vlaneseq
        %v429 = vshrl.u32 %v428, 7
        %v430 = vsub.s32 %v427, %v429
        %v431 = vrot.slane %v421, %v430
        %v433 = vunpack.c.l.s4 1983009808
        %v434 = vunpack.c.0.s8 %v433
        %v435 = vlaneseq
        %v436 = vshrl.u32 %v435, 7
        %v437 = vsub.s32 %v434, %v436
        %v438 = vrot.slane %v422, %v437
        %439 = vrot.lane.b32.xlu0 %v431, 64
        %v440 = vpop.permute.xlu0 %439
        %441 = vrot.lane.b32.xlu0 %v438, 64
        %v442 = vpop.permute.xlu0 %441
        %vm445 = vcmask 1041920
        %446 = vst.msk [vmem:[#allocation3] sm:$0x3] %vm445, %v440
        %447 = vst.msk [vmem:[#allocation3 + $0xa] sm:$0x3] %vm445, %v442
        %v448 = vld [vmem:[#allocation2 + $0x2] sm:$0x3]
        %v449 = vld [vmem:[#allocation2 + $0x6] sm:$0x3]
        %450 = vst.msk [vmem:[#allocation3 + $0x2] sm:$0x3] %vm394, %v448
        %451 = vst.msk [vmem:[#allocation3 + $0xc] sm:$0x3] %vm394, %v449
        %v452 = vld [vmem:[%s393] sm:$0x3]
        %v453 = vld [vmem:[%s393 + $0x4] sm:$0x3]
        %v457 = vunpack.c.l.s4 1983009808
        %v458 = vunpack.c.0.s8 %v457
        %v459 = vlaneseq
        %v460 = vshrl.u32 %v459, 7
        %v461 = vsub.s32 %v458, %v460
        %v462 = vrot.slane %v452, %v461
        %v464 = vunpack.c.l.s4 1983009808
        %v465 = vunpack.c.0.s8 %v464
        %v466 = vlaneseq
        %v467 = vshrl.u32 %v466, 7
        %v468 = vsub.s32 %v465, %v467
        %v469 = vrot.slane %v453, %v468
        %470 = vrot.lane.b32.xlu0 %v462, 64
        %v471 = vpop.permute.xlu0 %470
        %472 = vrot.lane.b32.xlu0 %v469, 64
        %v473 = vpop.permute.xlu0 %472
        %476 = vst.msk [vmem:[#allocation3 + $0x2] sm:$0x3] %vm445, %v471
        %477 = vst.msk [vmem:[#allocation3 + $0xc] sm:$0x3] %vm445, %v473
        %v478 = vld [vmem:[%s393 + $0x1] sm:$0x3]
        %v479 = vld [vmem:[%s393 + $0x5] sm:$0x3]
        %480 = vst.msk [vmem:[#allocation3 + $0x4] sm:$0x3] %vm394, %v478
        %481 = vst.msk [vmem:[#allocation3 + $0xe] sm:$0x3] %vm394, %v479
        %v482 = vld [vmem:[%s393 + $0x2] sm:$0x3]
        %v483 = vld [vmem:[%s393 + $0x6] sm:$0x3]
        %v487 = vunpack.c.l.s4 1983009808
        %v488 = vunpack.c.0.s8 %v487
        %v489 = vlaneseq
        %v490 = vshrl.u32 %v489, 7
        %v491 = vsub.s32 %v488, %v490
        %v492 = vrot.slane %v482, %v491
        %v494 = vunpack.c.l.s4 1983009808
        %v495 = vunpack.c.0.s8 %v494
        %v496 = vlaneseq
        %v497 = vshrl.u32 %v496, 7
        %v498 = vsub.s32 %v495, %v497
        %v499 = vrot.slane %v483, %v498
        %500 = vrot.lane.b32.xlu0 %v492, 64
        %v501 = vpop.permute.xlu0 %500
        %502 = vrot.lane.b32.xlu0 %v499, 64
        %v503 = vpop.permute.xlu0 %502
        %506 = vst.msk [vmem:[#allocation3 + $0x4] sm:$0x3] %vm445, %v501
        %507 = vst.msk [vmem:[#allocation3 + $0xe] sm:$0x3] %vm445, %v503
        %s508 = scalar_lea.vmem [#allocation2], 8
        %v509 = vld [vmem:[%s508] sm:$0x3]
        %v510 = vld [vmem:[%s508 + $0x4] sm:$0x3]
        %511 = vst.msk [vmem:[#allocation3 + $0x6] sm:$0x3] %vm394, %v509
        %512 = vst.msk [vmem:[#allocation3 + $0x10] sm:$0x3] %vm394, %v510
        %v513 = vld [vmem:[%s508 + $0x1] sm:$0x3]
        %v514 = vld [vmem:[%s508 + $0x5] sm:$0x3]
        %v518 = vunpack.c.l.s4 1983009808
        %v519 = vunpack.c.0.s8 %v518
        %v520 = vlaneseq
        %v521 = vshrl.u32 %v520, 7
        %v522 = vsub.s32 %v519, %v521
        %v523 = vrot.slane %v513, %v522
        %v525 = vunpack.c.l.s4 1983009808
        %v526 = vunpack.c.0.s8 %v525
        %v527 = vlaneseq
        %v528 = vshrl.u32 %v527, 7
        %v529 = vsub.s32 %v526, %v528
        %v530 = vrot.slane %v514, %v529
        %531 = vrot.lane.b32.xlu0 %v523, 64
        %v532 = vpop.permute.xlu0 %531
        %533 = vrot.lane.b32.xlu0 %v530, 64
        %v534 = vpop.permute.xlu0 %533
        %537 = vst.msk [vmem:[#allocation3 + $0x6] sm:$0x3] %vm445, %v532
        %538 = vst.msk [vmem:[#allocation3 + $0x10] sm:$0x3] %vm445, %v534
        %v539 = vld [vmem:[%s508 + $0x2] sm:$0x3]
        %v540 = vld [vmem:[%s508 + $0x6] sm:$0x3]
        %541 = vst.msk [vmem:[#allocation3 + $0x8] sm:$0x3] %vm394, %v539
        %542 = vst.msk [vmem:[#allocation3 + $0x12] sm:$0x3] %vm394, %v540
        %v543 = vld [vmem:[#allocation3] sm:$0xff]
        %v544 = vld [vmem:[#allocation3 + $0x8] sm:$0x3]
        %v545 = vld [vmem:[#allocation10] sm:$0xff]
        %v546 = vld [vmem:[#allocation10 + $0x8] sm:$0xff]
        %v547 = vld [vmem:[#allocation10 + $0x10] sm:$0xff]
        %v548 = vld [vmem:[#allocation10 + $0x18] sm:$0xff]
        %v549 = vld [vmem:[#allocation10 + $0x20] sm:$0xff]
        %v550 = vld [vmem:[#allocation10 + $0x28] sm:$0xff]
        %v551 = vld [vmem:[#allocation10 + $0x30] sm:$0xff]
        %v552 = vld [vmem:[#allocation10 + $0x38] sm:$0xff]
        %v553 = vld [vmem:[#allocation10 + $0x40] sm:$0xff]
        %v554 = vld [vmem:[#allocation10 + $0x48] sm:$0xff]
        %v555 = vld [vmem:[#allocation10 + $0x50] sm:$0xff]
        %v556 = vld [vmem:[#allocation10 + $0x58] sm:$0xff]
        %v557 = vld [vmem:[#allocation10 + $0x60] sm:$0xff]
        %v558 = vld [vmem:[#allocation10 + $0x68] sm:$0xff]
        %v559 = vld [vmem:[#allocation10 + $0x70] sm:$0xff]
        %v560 = vld [vmem:[#allocation10 + $0x78] sm:$0xff]
        %v561 = vld [vmem:[#allocation10 + $0x80] sm:$0xff]
        %v562 = vld [vmem:[#allocation10 + $0x88] sm:$0xff]
        %v563 = vld [vmem:[#allocation10 + $0x90] sm:$0xff]
        %v564 = vld [vmem:[#allocation10 + $0x98] sm:$0xff]
        %v565 = vld [vmem:[#allocation10 + $0xa0] sm:$0xff]
        %v566 = vld [vmem:[#allocation10 + $0xa8] sm:$0xff]
        %v567 = vld [vmem:[#allocation10 + $0xb0] sm:$0xff]
        %v568 = vld [vmem:[#allocation10 + $0xb8] sm:$0xff]
        %v569 = vld [vmem:[#allocation10 + $0xc0] sm:$0xff]
        %v570 = vld [vmem:[#allocation10 + $0xc8] sm:$0xff]
        %v571 = vld [vmem:[#allocation10 + $0xd0] sm:$0xff]
        %v572 = vld [vmem:[#allocation10 + $0xd8] sm:$0xff]
        %v573 = vld [vmem:[#allocation10 + $0xe0] sm:$0xff]
        %v574 = vld [vmem:[#allocation10 + $0xe8] sm:$0xff]
        %v575 = vld [vmem:[#allocation10 + $0xf0] sm:$0xff]
        %v576 = vld [vmem:[#allocation10 + $0xf8] sm:$0xff]
        %v577 = vld [vmem:[#allocation10 + $0x100] sm:$0xff]
        %v578 = vld [vmem:[#allocation10 + $0x108] sm:$0xff]
        %v579 = vld [vmem:[#allocation10 + $0x110] sm:$0xff]
        %v580 = vld [vmem:[#allocation10 + $0x118] sm:$0xff]
        %v581 = vld [vmem:[#allocation10 + $0x120] sm:$0xff]
        %v582 = vld [vmem:[#allocation10 + $0x128] sm:$0xff]
        %v583 = vld [vmem:[#allocation10 + $0x130] sm:$0xff]
        %v584 = vld [vmem:[#allocation10 + $0x138] sm:$0xff]
        %v585 = vld [vmem:[#allocation10 + $0x140] sm:$0xff]
        %v586 = vld [vmem:[#allocation10 + $0x148] sm:$0xff]
        %v587 = vld [vmem:[#allocation10 + $0x150] sm:$0xff]
        %v588 = vld [vmem:[#allocation10 + $0x158] sm:$0xff]
        %v589 = vld [vmem:[#allocation10 + $0x160] sm:$0xff]
        %v590 = vld [vmem:[#allocation10 + $0x168] sm:$0xff]
        %v591 = vld [vmem:[#allocation10 + $0x170] sm:$0xff]
        %v592 = vld [vmem:[#allocation10 + $0x178] sm:$0xff]
        %v593 = vld [vmem:[#allocation10 + $0x180] sm:$0xff]
        %v594 = vld [vmem:[#allocation10 + $0x188] sm:$0xff]
        %v595 = vld [vmem:[#allocation10 + $0x190] sm:$0xff]
        %v596 = vld [vmem:[#allocation10 + $0x198] sm:$0xff]
        %v597 = vld [vmem:[#allocation10 + $0x1a0] sm:$0xff]
        %v598 = vld [vmem:[#allocation10 + $0x1a8] sm:$0xff]
        %v599 = vld [vmem:[#allocation10 + $0x1b0] sm:$0xff]
        %v600 = vld [vmem:[#allocation10 + $0x1b8] sm:$0xff]
        %v601 = vld [vmem:[#allocation10 + $0x1c0] sm:$0xff]
        %v602 = vld [vmem:[#allocation10 + $0x1c8] sm:$0xff]
        %v603 = vld [vmem:[#allocation10 + $0x1d0] sm:$0xff]
        %v604 = vld [vmem:[#allocation10 + $0x1d8] sm:$0xff]
        %v605 = vld [vmem:[#allocation10 + $0x1e0] sm:$0xff]
        %v606 = vld [vmem:[#allocation10 + $0x1e8] sm:$0xff]
        %v607 = vld [vmem:[#allocation10 + $0x1f0] sm:$0xff]
        %v608 = vld [vmem:[#allocation10 + $0x1f8] sm:$0xff]
        %v609 = vld [vmem:[#allocation10 + $0x200] sm:$0xff]
        %v610 = vld [vmem:[#allocation10 + $0x208] sm:$0xff]
        %v611 = vld [vmem:[#allocation10 + $0x210] sm:$0xff]
        %v612 = vld [vmem:[#allocation10 + $0x218] sm:$0xff]
        %v613 = vld [vmem:[#allocation10 + $0x220] sm:$0xff]
        %v614 = vld [vmem:[#allocation10 + $0x228] sm:$0xff]
        %v615 = vld [vmem:[#allocation10 + $0x230] sm:$0xff]
        %v616 = vld [vmem:[#allocation10 + $0x238] sm:$0xff]
        %v617 = vld [vmem:[#allocation10 + $0x240] sm:$0xff]
        %v618 = vld [vmem:[#allocation10 + $0x248] sm:$0xff]
        %v619 = vld [vmem:[#allocation10 + $0x250] sm:$0xff]
        %v620 = vld [vmem:[#allocation10 + $0x258] sm:$0xff]
        %v621 = vld [vmem:[#allocation10 + $0x260] sm:$0xff]
        %v622 = vld [vmem:[#allocation10 + $0x268] sm:$0xff]
        %v623 = vld [vmem:[#allocation10 + $0x270] sm:$0xff]
        %v624 = vld [vmem:[#allocation10 + $0x278] sm:$0xff]
        %v625 = vld [vmem:[#allocation10 + $0x280] sm:$0xff]
        %v626 = vld [vmem:[#allocation10 + $0x288] sm:$0xff]
        %v627 = vld [vmem:[#allocation10 + $0x290] sm:$0xff]
        %v628 = vld [vmem:[#allocation10 + $0x298] sm:$0xff]
        %v629 = vld [vmem:[#allocation10 + $0x2a0] sm:$0xff]
        %v630 = vld [vmem:[#allocation10 + $0x2a8] sm:$0xff]
        %v631 = vld [vmem:[#allocation10 + $0x2b0] sm:$0xff]
        %v632 = vld [vmem:[#allocation10 + $0x2b8] sm:$0xff]
        %v633 = vld [vmem:[#allocation10 + $0x2c0] sm:$0xff]
        %v634 = vld [vmem:[#allocation10 + $0x2c8] sm:$0xff]
        %v635 = vld [vmem:[#allocation10 + $0x2d0] sm:$0xff]
        %v636 = vld [vmem:[#allocation10 + $0x2d8] sm:$0xff]
        %v637 = vld [vmem:[#allocation10 + $0x2e0] sm:$0xff]
        %v638 = vld [vmem:[#allocation10 + $0x2e8] sm:$0xff]
        %v639 = vld [vmem:[#allocation10 + $0x2f0] sm:$0xff]
        %v640 = vld [vmem:[#allocation10 + $0x2f8] sm:$0xff]
        %v641 = vld [vmem:[#allocation10 + $0x300] sm:$0xff]
        %v642 = vld [vmem:[#allocation10 + $0x308] sm:$0xff]
        %v643 = vld [vmem:[#allocation10 + $0x310] sm:$0xff]
        %v644 = vld [vmem:[#allocation10 + $0x318] sm:$0xff]
        %v645 = vld [vmem:[#allocation10 + $0x320] sm:$0xff]
        %v646 = vld [vmem:[#allocation10 + $0x328] sm:$0xff]
        %v647 = vld [vmem:[#allocation10 + $0x330] sm:$0xff]
        %v648 = vld [vmem:[#allocation10 + $0x338] sm:$0xff]
        %v649 = vld [vmem:[#allocation10 + $0x340] sm:$0xff]
        %v650 = vld [vmem:[#allocation10 + $0x348] sm:$0xff]
        %v651 = vld [vmem:[#allocation10 + $0x350] sm:$0xff]
        %v652 = vld [vmem:[#allocation10 + $0x358] sm:$0xff]
        %v653 = vld [vmem:[#allocation10 + $0x360] sm:$0xff]
        %v654 = vld [vmem:[#allocation10 + $0x368] sm:$0xff]
        %v655 = vld [vmem:[#allocation10 + $0x370] sm:$0xff]
        %v656 = vld [vmem:[#allocation10 + $0x378] sm:$0xff]
        %v657 = vld [vmem:[#allocation10 + $0x380] sm:$0xff]
        %v658 = vld [vmem:[#allocation10 + $0x388] sm:$0xff]
        %v659 = vld [vmem:[#allocation10 + $0x390] sm:$0xff]
        %v660 = vld [vmem:[#allocation10 + $0x398] sm:$0xff]
        %v661 = vld [vmem:[#allocation10 + $0x3a0] sm:$0xff]
        %v662 = vld [vmem:[#allocation10 + $0x3a8] sm:$0xff]
        %v663 = vld [vmem:[#allocation10 + $0x3b0] sm:$0xff]
        %v664 = vld [vmem:[#allocation10 + $0x3b8] sm:$0xff]
        %v665 = vld [vmem:[#allocation10 + $0x3c0] sm:$0xff]
        %v666 = vld [vmem:[#allocation10 + $0x3c8] sm:$0xff]
        %v667 = vld [vmem:[#allocation10 + $0x3d0] sm:$0xff]
        %v668 = vld [vmem:[#allocation10 + $0x3d8] sm:$0xff]
        %v669 = vld [vmem:[#allocation10 + $0x3e0] sm:$0xff]
        %v670 = vld [vmem:[#allocation10 + $0x3e8] sm:$0xff]
        %v671 = vld [vmem:[#allocation10 + $0x3f0] sm:$0xff]
        %v672 = vld [vmem:[#allocation10 + $0x3f8] sm:$0xff]
        %v673 = vld [vmem:[#allocation10 + $0x400] sm:$0xff]
        %v674 = vld [vmem:[#allocation10 + $0x408] sm:$0xff]
        %v675 = vld [vmem:[#allocation10 + $0x410] sm:$0xff]
        %v676 = vld [vmem:[#allocation10 + $0x418] sm:$0xff]
        %v677 = vld [vmem:[#allocation10 + $0x420] sm:$0xff]
        %v678 = vld [vmem:[#allocation10 + $0x428] sm:$0xff]
        %v679 = vld [vmem:[#allocation10 + $0x430] sm:$0xff]
        %v680 = vld [vmem:[#allocation10 + $0x438] sm:$0xff]
        %v681 = vld [vmem:[#allocation10 + $0x440] sm:$0xff]
        %v682 = vld [vmem:[#allocation10 + $0x448] sm:$0xff]
        %v683 = vld [vmem:[#allocation10 + $0x450] sm:$0xff]
        %v684 = vld [vmem:[#allocation10 + $0x458] sm:$0xff]
        %v685 = vld [vmem:[#allocation10 + $0x460] sm:$0xff]
        %v686 = vld [vmem:[#allocation10 + $0x468] sm:$0xff]
        %v687 = vld [vmem:[#allocation10 + $0x470] sm:$0xff]
        %v688 = vld [vmem:[#allocation10 + $0x478] sm:$0xff]
        %v689 = vld [vmem:[%s4] sm:$0x3]
        %v691 = vlaneseq
        %v692 = vshrl.u32 %v691, 7
        %v693 = vsub.s32 0, %v692
        %v694 = vrot.slane %v689, %v693
        %v695 = vlaneseq
        %v696 = vshrl.u32 %v695, 7
        %v697 = vsub.s32 1, %v696
        %v698 = vrot.slane %v689, %v697
        %v703 = vcombine.high %v543, %v543
        %v705 = vunpack.c.l.s4 1983009808
        %v706 = vunpack.c.0.s8 %v705
        %v707 = vlaneseq
        %v708 = vshrl.u32 %v707, 7
        %v709 = vsub.s32 %v706, %v708
        %v710 = vrot.slane %v543, %v709
        %v712 = vunpack.c.l.s4 1983009808
        %v713 = vunpack.c.0.s8 %v712
        %v714 = vlaneseq
        %v715 = vshrl.u32 %v714, 7
        %v716 = vsub.s32 %v713, %v715
        %v717 = vrot.slane %v703, %v716
        %v718 = vcombine.high %v710, %v710
        %v719 = vcombine.high %v717, %v717
        %v721 = vunpack.c.l.s4 1983009808
        %v722 = vunpack.c.0.s8 %v721
        %v723 = vlaneseq
        %v724 = vshrl.u32 %v723, 7
        %v725 = vsub.s32 %v722, %v724
        %v726 = vrot.slane %v544, %v725
        %vm731 = vcmask 523264
        %v732 = vsel %vm731, %v726, 0
        %734 = vmatprep.subr.mxu0 %v576
        %735 = vmatpush1.msra.mxu0 %v575
        %736 = vmatprep.subr.mxu0 %v574
        %737 = vmatpush1.msra.mxu0 %v573
        %738 = vmatprep.subr.mxu0 %v572
        %739 = vmatpush1.msra.mxu0 %v571
        %740 = vmatprep.subr.mxu0 %v570
        %741 = vmatpush1.msra.mxu0 %v569
        %742 = vmatprep.subr.mxu0 %v568
        %743 = vmatpush1.msra.mxu0 %v567
        %744 = vmatprep.subr.mxu0 %v566
        %745 = vmatpush1.msra.mxu0 %v565
        %746 = vmatprep.subr.mxu0 %v564
        %747 = vmatpush1.msra.mxu0 %v563
        %748 = vmatprep.subr.mxu0 %v562
        %749 = vmatpush1.msra.mxu0 %v561
        %750 = vmatprep.subr.mxu0 %v560
        %751 = vmatpush1.msra.mxu0 %v559
        %752 = vmatprep.subr.mxu0 %v558
        %753 = vmatpush1.msra.mxu0 %v557
        %754 = vmatprep.subr.mxu0 %v556
        %755 = vmatpush1.msra.mxu0 %v555
        %756 = vmatprep.subr.mxu0 %v554
        %757 = vmatpush1.msra.mxu0 %v553
        %758 = vmatprep.subr.mxu0 %v552
        %759 = vmatpush1.msra.mxu0 %v551
        %760 = vmatprep.subr.mxu0 %v550
        %761 = vmatpush1.msra.mxu0 %v549
        %762 = vmatprep.subr.mxu0 %v548
        %763 = vmatpush1.msra.mxu0 %v547
        %764 = vmatprep.subr.mxu0 %v546
        %765 = vmatpush1.msra.mxu0 %v545
        %766 = vmatprep.subr.mxu0 %v608
        %767 = vmatpush2.msra.mxu0 %v607
        %768 = vmatprep.subr.mxu0 %v606
        %769 = vmatpush2.msra.mxu0 %v605
        %770 = vmatprep.subr.mxu0 %v604
        %771 = vmatpush2.msra.mxu0 %v603
        %772 = vmatprep.subr.mxu0 %v602
        %773 = vmatpush2.msra.mxu0 %v601
        %774 = vmatprep.subr.mxu0 %v600
        %775 = vmatpush2.msra.mxu0 %v599
        %776 = vmatprep.subr.mxu0 %v598
        %777 = vmatpush2.msra.mxu0 %v597
        %778 = vmatprep.subr.mxu0 %v596
        %779 = vmatpush2.msra.mxu0 %v595
        %780 = vmatprep.subr.mxu0 %v594
        %781 = vmatpush2.msra.mxu0 %v593
        %782 = vmatprep.subr.mxu0 %v592
        %783 = vmatpush2.msra.mxu0 %v591
        %784 = vmatprep.subr.mxu0 %v590
        %785 = vmatpush2.msra.mxu0 %v589
        %786 = vmatprep.subr.mxu0 %v588
        %787 = vmatpush2.msra.mxu0 %v587
        %788 = vmatprep.subr.mxu0 %v586
        %789 = vmatpush2.msra.mxu0 %v585
        %790 = vmatprep.subr.mxu0 %v584
        %791 = vmatpush2.msra.mxu0 %v583
        %792 = vmatprep.subr.mxu0 %v582
        %793 = vmatpush2.msra.mxu0 %v581
        %794 = vmatprep.subr.mxu0 %v580
        %795 = vmatpush2.msra.mxu0 %v579
        %796 = vmatprep.subr.mxu0 %v578
        %797 = vmatpush2.msra.mxu0 %v577
        %798 = vmatprep.mubr.f32.mxu0 %v718
        %799 = vmatmul.mubr.f32.gmra.mxu0 %v710
        %v800 = vpop.f32.mrf.mxu0
        %v801 = vadd.f32 %v694, %v800
        %v802 = vpop.f32.mrf.mxu0
        %v803 = vadd.f32 %v698, %v802
        %804 = vdwg.mxu0
        %805 = vmatprep.subr.mxu0 %v640
        %806 = vmatpush1.msra.mxu0 %v639
        %807 = vmatprep.subr.mxu0 %v638
        %808 = vmatpush1.msra.mxu0 %v637
        %809 = vmatprep.subr.mxu0 %v636
        %810 = vmatpush1.msra.mxu0 %v635
        %811 = vmatprep.subr.mxu0 %v634
        %812 = vmatpush1.msra.mxu0 %v633
        %813 = vmatprep.subr.mxu0 %v632
        %814 = vmatpush1.msra.mxu0 %v631
        %815 = vmatprep.subr.mxu0 %v630
        %816 = vmatpush1.msra.mxu0 %v629
        %817 = vmatprep.subr.mxu0 %v628
        %818 = vmatpush1.msra.mxu0 %v627
        %819 = vmatprep.subr.mxu0 %v626
        %820 = vmatpush1.msra.mxu0 %v625
        %821 = vmatprep.subr.mxu0 %v624
        %822 = vmatpush1.msra.mxu0 %v623
        %823 = vmatprep.subr.mxu0 %v622
        %824 = vmatpush1.msra.mxu0 %v621
        %825 = vmatprep.subr.mxu0 %v620
        %826 = vmatpush1.msra.mxu0 %v619
        %827 = vmatprep.subr.mxu0 %v618
        %828 = vmatpush1.msra.mxu0 %v617
        %829 = vmatprep.subr.mxu0 %v616
        %830 = vmatpush1.msra.mxu0 %v615
        %831 = vmatprep.subr.mxu0 %v614
        %832 = vmatpush1.msra.mxu0 %v613
        %833 = vmatprep.subr.mxu0 %v612
        %834 = vmatpush1.msra.mxu0 %v611
        %835 = vmatprep.subr.mxu0 %v610
        %836 = vmatpush1.msra.mxu0 %v609
        %837 = vmatprep.subr.mxu0 %v672
        %838 = vmatpush2.msra.mxu0 %v671
        %839 = vmatprep.subr.mxu0 %v670
        %840 = vmatpush2.msra.mxu0 %v669
        %841 = vmatprep.subr.mxu0 %v668
        %842 = vmatpush2.msra.mxu0 %v667
        %843 = vmatprep.subr.mxu0 %v666
        %844 = vmatpush2.msra.mxu0 %v665
        %845 = vmatprep.subr.mxu0 %v664
        %846 = vmatpush2.msra.mxu0 %v663
        %847 = vmatprep.subr.mxu0 %v662
        %848 = vmatpush2.msra.mxu0 %v661
        %849 = vmatprep.subr.mxu0 %v660
        %850 = vmatpush2.msra.mxu0 %v659
        %851 = vmatprep.subr.mxu0 %v658
        %852 = vmatpush2.msra.mxu0 %v657
        %853 = vmatprep.subr.mxu0 %v656
        %854 = vmatpush2.msra.mxu0 %v655
        %855 = vmatprep.subr.mxu0 %v654
        %856 = vmatpush2.msra.mxu0 %v653
        %857 = vmatprep.subr.mxu0 %v652
        %858 = vmatpush2.msra.mxu0 %v651
        %859 = vmatprep.subr.mxu0 %v650
        %860 = vmatpush2.msra.mxu0 %v649
        %861 = vmatprep.subr.mxu0 %v648
        %862 = vmatpush2.msra.mxu0 %v647
        %863 = vmatprep.subr.mxu0 %v646
        %864 = vmatpush2.msra.mxu0 %v645
        %865 = vmatprep.subr.mxu0 %v644
        %866 = vmatpush2.msra.mxu0 %v643
        %867 = vmatprep.subr.mxu0 %v642
        %868 = vmatpush2.msra.mxu0 %v641
        %869 = vmatprep.mubr.f32.mxu0 %v719
        %870 = vmatmul.mubr.f32.gmra.mxu0 %v717
        %v871 = vpop.f32.mrf.mxu0
        %v872 = vadd.f32 %v801, %v871
        %v873 = vpop.f32.mrf.mxu0
        %v874 = vadd.f32 %v803, %v873
        %875 = vdwg.mxu0
        %876 = vmatprep.subr.mxu0 0.0
        %877 = vmatpush1.msra.mxu0 0.0
        %878 = vmatprep.subr.mxu0 0.0
        %879 = vmatpush1.msra.mxu0 0.0
        %880 = vmatprep.subr.mxu0 0.0
        %881 = vmatpush1.msra.mxu0 0.0
        %882 = vmatprep.subr.mxu0 0.0
        %883 = vmatpush1.msra.mxu0 0.0
        %884 = vmatprep.subr.mxu0 0.0
        %885 = vmatpush1.msra.mxu0 0.0
        %886 = vmatprep.subr.mxu0 0.0
        %887 = vmatpush1.msra.mxu0 0.0
        %888 = vmatprep.subr.mxu0 0.0
        %889 = vmatpush1.msra.mxu0 0.0
        %890 = vmatprep.subr.mxu0 0.0
        %891 = vmatpush1.msra.mxu0 0.0
        %892 = vmatprep.subr.mxu0 %v688
        %893 = vmatpush1.msra.mxu0 %v687
        %894 = vmatprep.subr.mxu0 %v686
        %895 = vmatpush1.msra.mxu0 %v685
        %896 = vmatprep.subr.mxu0 %v684
        %897 = vmatpush1.msra.mxu0 %v683
        %898 = vmatprep.subr.mxu0 %v682
        %899 = vmatpush1.msra.mxu0 %v681
        %900 = vmatprep.subr.mxu0 %v680
        %901 = vmatpush1.msra.mxu0 %v679
        %902 = vmatprep.subr.mxu0 %v678
        %903 = vmatpush1.msra.mxu0 %v677
        %904 = vmatprep.subr.mxu0 %v676
        %905 = vmatpush1.msra.mxu0 %v675
        %906 = vmatprep.subr.mxu0 %v674
        %907 = vmatpush1.msra.mxu0 %v673
        %908 = vmatprep.subr.mxu0 0.0
        %909 = vmatpush2.msra.mxu0 0.0
        %910 = vmatprep.subr.mxu0 0.0
        %911 = vmatpush2.msra.mxu0 0.0
        %912 = vmatprep.subr.mxu0 0.0
        %913 = vmatpush2.msra.mxu0 0.0
        %914 = vmatprep.subr.mxu0 0.0
        %915 = vmatpush2.msra.mxu0 0.0
        %916 = vmatprep.subr.mxu0 0.0
        %917 = vmatpush2.msra.mxu0 0.0
        %918 = vmatprep.subr.mxu0 0.0
        %919 = vmatpush2.msra.mxu0 0.0
        %920 = vmatprep.subr.mxu0 0.0
        %921 = vmatpush2.msra.mxu0 0.0
        %922 = vmatprep.subr.mxu0 0.0
        %923 = vmatpush2.msra.mxu0 0.0
        %924 = vmatprep.subr.mxu0 0.0
        %925 = vmatpush2.msra.mxu0 0.0
        %926 = vmatprep.subr.mxu0 0.0
        %927 = vmatpush2.msra.mxu0 0.0
        %928 = vmatprep.subr.mxu0 0.0
        %929 = vmatpush2.msra.mxu0 0.0
        %930 = vmatprep.subr.mxu0 0.0
        %931 = vmatpush2.msra.mxu0 0.0
        %932 = vmatprep.subr.mxu0 0.0
        %933 = vmatpush2.msra.mxu0 0.0
        %934 = vmatprep.subr.mxu0 0.0
        %935 = vmatpush2.msra.mxu0 0.0
        %936 = vmatprep.subr.mxu0 0.0
        %937 = vmatpush2.msra.mxu0 0.0
        %938 = vmatprep.subr.mxu0 0.0
        %939 = vmatpush2.msra.mxu0 0.0
        %940 = vmatprep.mubr.f32.mxu0 0.0
        %941 = vmatmul.mubr.f32.gmra.mxu0 %v732
        %v942 = vpop.f32.mrf.mxu0
        %v943 = vadd.f32 %v872, %v942
        %v944 = vpop.f32.mrf.mxu0
        %v945 = vadd.f32 %v874, %v944
        %946 = vdwg.mxu0
        %vm947 = vcmp.gt.f32.partialorder %v943, 0.0
        %vm948 = vcmp.gt.f32.partialorder %v945, 0.0
        %v949 = vmin.f32 %v943, 0.0
        %v950 = vmin.f32 %v945, 0.0
        %v951 = vmul.f32 %v949, 1.442695
        %v952 = vpow.pop %v951
        %v953 = vmul.f32 %v950, 1.442695
        %v954 = vpow.pop %v953
        %v955 = vsub.f32 %v952, 1.0
        %v956 = vsub.f32 %v954, 1.0
        %v957 = vsel %vm947, %v943, %v955
        %v958 = vsel %vm948, %v945, %v956
        %v961 = vcombine.low %v957, %v958
        %v963 = vunpack.c.l.s4 1983009808
        %v964 = vunpack.c.0.s8 %v963
        %v965 = vlaneseq
        %v966 = vshrl.u32 %v965, 7
        %v967 = vsub.s32 %v964, %v966
        %v968 = vrot.slane %v961, %v967
        %970 = vst [vmem:[%s378] sm:$0xf] %v968
        %971 = vst [vmem:[%s378 + $0x4] sm:$0xf] %v968
        %s972 = scalar_lea.vmem [#allocation3], 10
        %v973 = vld [vmem:[%s972] sm:$0xff]
        %v974 = vld [vmem:[%s972 + $0x8] sm:$0x3]
        %v975 = vld [vmem:[#allocation10] sm:$0xff]
        %v976 = vld [vmem:[#allocation10 + $0x8] sm:$0xff]
        %v977 = vld [vmem:[#allocation10 + $0x10] sm:$0xff]
        %v978 = vld [vmem:[#allocation10 + $0x18] sm:$0xff]
        %v979 = vld [vmem:[#allocation10 + $0x20] sm:$0xff]
        %v980 = vld [vmem:[#allocation10 + $0x28] sm:$0xff]
        %v981 = vld [vmem:[#allocation10 + $0x30] sm:$0xff]
        %v982 = vld [vmem:[#allocation10 + $0x38] sm:$0xff]
        %v983 = vld [vmem:[#allocation10 + $0x40] sm:$0xff]
        %v984 = vld [vmem:[#allocation10 + $0x48] sm:$0xff]
        %v985 = vld [vmem:[#allocation10 + $0x50] sm:$0xff]
        %v986 = vld [vmem:[#allocation10 + $0x58] sm:$0xff]
        %v987 = vld [vmem:[#allocation10 + $0x60] sm:$0xff]
        %v988 = vld [vmem:[#allocation10 + $0x68] sm:$0xff]
        %v989 = vld [vmem:[#allocation10 + $0x70] sm:$0xff]
        %v990 = vld [vmem:[#allocation10 + $0x78] sm:$0xff]
        %v991 = vld [vmem:[#allocation10 + $0x80] sm:$0xff]
        %v992 = vld [vmem:[#allocation10 + $0x88] sm:$0xff]
        %v993 = vld [vmem:[#allocation10 + $0x90] sm:$0xff]
        %v994 = vld [vmem:[#allocation10 + $0x98] sm:$0xff]
        %v995 = vld [vmem:[#allocation10 + $0xa0] sm:$0xff]
        %v996 = vld [vmem:[#allocation10 + $0xa8] sm:$0xff]
        %v997 = vld [vmem:[#allocation10 + $0xb0] sm:$0xff]
        %v998 = vld [vmem:[#allocation10 + $0xb8] sm:$0xff]
        %v999 = vld [vmem:[#allocation10 + $0xc0] sm:$0xff]
        %v1000 = vld [vmem:[#allocation10 + $0xc8] sm:$0xff]
        %v1001 = vld [vmem:[#allocation10 + $0xd0] sm:$0xff]
        %v1002 = vld [vmem:[#allocation10 + $0xd8] sm:$0xff]
        %v1003 = vld [vmem:[#allocation10 + $0xe0] sm:$0xff]
        %v1004 = vld [vmem:[#allocation10 + $0xe8] sm:$0xff]
        %v1005 = vld [vmem:[#allocation10 + $0xf0] sm:$0xff]
        %v1006 = vld [vmem:[#allocation10 + $0xf8] sm:$0xff]
        %v1007 = vld [vmem:[#allocation10 + $0x100] sm:$0xff]
        %v1008 = vld [vmem:[#allocation10 + $0x108] sm:$0xff]
        %v1009 = vld [vmem:[#allocation10 + $0x110] sm:$0xff]
        %v1010 = vld [vmem:[#allocation10 + $0x118] sm:$0xff]
        %v1011 = vld [vmem:[#allocation10 + $0x120] sm:$0xff]
        %v1012 = vld [vmem:[#allocation10 + $0x128] sm:$0xff]
        %v1013 = vld [vmem:[#allocation10 + $0x130] sm:$0xff]
        %v1014 = vld [vmem:[#allocation10 + $0x138] sm:$0xff]
        %v1015 = vld [vmem:[#allocation10 + $0x140] sm:$0xff]
        %v1016 = vld [vmem:[#allocation10 + $0x148] sm:$0xff]
        %v1017 = vld [vmem:[#allocation10 + $0x150] sm:$0xff]
        %v1018 = vld [vmem:[#allocation10 + $0x158] sm:$0xff]
        %v1019 = vld [vmem:[#allocation10 + $0x160] sm:$0xff]
        %v1020 = vld [vmem:[#allocation10 + $0x168] sm:$0xff]
        %v1021 = vld [vmem:[#allocation10 + $0x170] sm:$0xff]
        %v1022 = vld [vmem:[#allocation10 + $0x178] sm:$0xff]
        %v1023 = vld [vmem:[#allocation10 + $0x180] sm:$0xff]
        %v1024 = vld [vmem:[#allocation10 + $0x188] sm:$0xff]
        %v1025 = vld [vmem:[#allocation10 + $0x190] sm:$0xff]
        %v1026 = vld [vmem:[#allocation10 + $0x198] sm:$0xff]
        %v1027 = vld [vmem:[#allocation10 + $0x1a0] sm:$0xff]
        %v1028 = vld [vmem:[#allocation10 + $0x1a8] sm:$0xff]
        %v1029 = vld [vmem:[#allocation10 + $0x1b0] sm:$0xff]
        %v1030 = vld [vmem:[#allocation10 + $0x1b8] sm:$0xff]
        %v1031 = vld [vmem:[#allocation10 + $0x1c0] sm:$0xff]
        %v1032 = vld [vmem:[#allocation10 + $0x1c8] sm:$0xff]
        %v1033 = vld [vmem:[#allocation10 + $0x1d0] sm:$0xff]
        %v1034 = vld [vmem:[#allocation10 + $0x1d8] sm:$0xff]
        %v1035 = vld [vmem:[#allocation10 + $0x1e0] sm:$0xff]
        %v1036 = vld [vmem:[#allocation10 + $0x1e8] sm:$0xff]
        %v1037 = vld [vmem:[#allocation10 + $0x1f0] sm:$0xff]
        %v1038 = vld [vmem:[#allocation10 + $0x1f8] sm:$0xff]
        %v1039 = vld [vmem:[#allocation10 + $0x200] sm:$0xff]
        %v1040 = vld [vmem:[#allocation10 + $0x208] sm:$0xff]
        %v1041 = vld [vmem:[#allocation10 + $0x210] sm:$0xff]
        %v1042 = vld [vmem:[#allocation10 + $0x218] sm:$0xff]
        %v1043 = vld [vmem:[#allocation10 + $0x220] sm:$0xff]
        %v1044 = vld [vmem:[#allocation10 + $0x228] sm:$0xff]
        %v1045 = vld [vmem:[#allocation10 + $0x230] sm:$0xff]
        %v1046 = vld [vmem:[#allocation10 + $0x238] sm:$0xff]
        %v1047 = vld [vmem:[#allocation10 + $0x240] sm:$0xff]
        %v1048 = vld [vmem:[#allocation10 + $0x248] sm:$0xff]
        %v1049 = vld [vmem:[#allocation10 + $0x250] sm:$0xff]
        %v1050 = vld [vmem:[#allocation10 + $0x258] sm:$0xff]
        %v1051 = vld [vmem:[#allocation10 + $0x260] sm:$0xff]
        %v1052 = vld [vmem:[#allocation10 + $0x268] sm:$0xff]
        %v1053 = vld [vmem:[#allocation10 + $0x270] sm:$0xff]
        %v1054 = vld [vmem:[#allocation10 + $0x278] sm:$0xff]
        %v1055 = vld [vmem:[#allocation10 + $0x280] sm:$0xff]
        %v1056 = vld [vmem:[#allocation10 + $0x288] sm:$0xff]
        %v1057 = vld [vmem:[#allocation10 + $0x290] sm:$0xff]
        %v1058 = vld [vmem:[#allocation10 + $0x298] sm:$0xff]
        %v1059 = vld [vmem:[#allocation10 + $0x2a0] sm:$0xff]
        %v1060 = vld [vmem:[#allocation10 + $0x2a8] sm:$0xff]
        %v1061 = vld [vmem:[#allocation10 + $0x2b0] sm:$0xff]
        %v1062 = vld [vmem:[#allocation10 + $0x2b8] sm:$0xff]
        %v1063 = vld [vmem:[#allocation10 + $0x2c0] sm:$0xff]
        %v1064 = vld [vmem:[#allocation10 + $0x2c8] sm:$0xff]
        %v1065 = vld [vmem:[#allocation10 + $0x2d0] sm:$0xff]
        %v1066 = vld [vmem:[#allocation10 + $0x2d8] sm:$0xff]
        %v1067 = vld [vmem:[#allocation10 + $0x2e0] sm:$0xff]
        %v1068 = vld [vmem:[#allocation10 + $0x2e8] sm:$0xff]
        %v1069 = vld [vmem:[#allocation10 + $0x2f0] sm:$0xff]
        %v1070 = vld [vmem:[#allocation10 + $0x2f8] sm:$0xff]
        %v1071 = vld [vmem:[#allocation10 + $0x300] sm:$0xff]
        %v1072 = vld [vmem:[#allocation10 + $0x308] sm:$0xff]
        %v1073 = vld [vmem:[#allocation10 + $0x310] sm:$0xff]
        %v1074 = vld [vmem:[#allocation10 + $0x318] sm:$0xff]
        %v1075 = vld [vmem:[#allocation10 + $0x320] sm:$0xff]
        %v1076 = vld [vmem:[#allocation10 + $0x328] sm:$0xff]
        %v1077 = vld [vmem:[#allocation10 + $0x330] sm:$0xff]
        %v1078 = vld [vmem:[#allocation10 + $0x338] sm:$0xff]
        %v1079 = vld [vmem:[#allocation10 + $0x340] sm:$0xff]
        %v1080 = vld [vmem:[#allocation10 + $0x348] sm:$0xff]
        %v1081 = vld [vmem:[#allocation10 + $0x350] sm:$0xff]
        %v1082 = vld [vmem:[#allocation10 + $0x358] sm:$0xff]
        %v1083 = vld [vmem:[#allocation10 + $0x360] sm:$0xff]
        %v1084 = vld [vmem:[#allocation10 + $0x368] sm:$0xff]
        %v1085 = vld [vmem:[#allocation10 + $0x370] sm:$0xff]
        %v1086 = vld [vmem:[#allocation10 + $0x378] sm:$0xff]
        %v1087 = vld [vmem:[#allocation10 + $0x380] sm:$0xff]
        %v1088 = vld [vmem:[#allocation10 + $0x388] sm:$0xff]
        %v1089 = vld [vmem:[#allocation10 + $0x390] sm:$0xff]
        %v1090 = vld [vmem:[#allocation10 + $0x398] sm:$0xff]
        %v1091 = vld [vmem:[#allocation10 + $0x3a0] sm:$0xff]
        %v1092 = vld [vmem:[#allocation10 + $0x3a8] sm:$0xff]
        %v1093 = vld [vmem:[#allocation10 + $0x3b0] sm:$0xff]
        %v1094 = vld [vmem:[#allocation10 + $0x3b8] sm:$0xff]
        %v1095 = vld [vmem:[#allocation10 + $0x3c0] sm:$0xff]
        %v1096 = vld [vmem:[#allocation10 + $0x3c8] sm:$0xff]
        %v1097 = vld [vmem:[#allocation10 + $0x3d0] sm:$0xff]
        %v1098 = vld [vmem:[#allocation10 + $0x3d8] sm:$0xff]
        %v1099 = vld [vmem:[#allocation10 + $0x3e0] sm:$0xff]
        %v1100 = vld [vmem:[#allocation10 + $0x3e8] sm:$0xff]
        %v1101 = vld [vmem:[#allocation10 + $0x3f0] sm:$0xff]
        %v1102 = vld [vmem:[#allocation10 + $0x3f8] sm:$0xff]
        %v1103 = vld [vmem:[#allocation10 + $0x400] sm:$0xff]
        %v1104 = vld [vmem:[#allocation10 + $0x408] sm:$0xff]
        %v1105 = vld [vmem:[#allocation10 + $0x410] sm:$0xff]
        %v1106 = vld [vmem:[#allocation10 + $0x418] sm:$0xff]
        %v1107 = vld [vmem:[#allocation10 + $0x420] sm:$0xff]
        %v1108 = vld [vmem:[#allocation10 + $0x428] sm:$0xff]
        %v1109 = vld [vmem:[#allocation10 + $0x430] sm:$0xff]
        %v1110 = vld [vmem:[#allocation10 + $0x438] sm:$0xff]
        %v1111 = vld [vmem:[#allocation10 + $0x440] sm:$0xff]
        %v1112 = vld [vmem:[#allocation10 + $0x448] sm:$0xff]
        %v1113 = vld [vmem:[#allocation10 + $0x450] sm:$0xff]
        %v1114 = vld [vmem:[#allocation10 + $0x458] sm:$0xff]
        %v1115 = vld [vmem:[#allocation10 + $0x460] sm:$0xff]
        %v1116 = vld [vmem:[#allocation10 + $0x468] sm:$0xff]
        %v1117 = vld [vmem:[#allocation10 + $0x470] sm:$0xff]
        %v1118 = vld [vmem:[#allocation10 + $0x478] sm:$0xff]
        %v1119 = vld [vmem:[%s4] sm:$0x3]
        %v1121 = vlaneseq
        %v1122 = vshrl.u32 %v1121, 7
        %v1123 = vsub.s32 0, %v1122
        %v1124 = vrot.slane %v1119, %v1123
        %v1125 = vlaneseq
        %v1126 = vshrl.u32 %v1125, 7
        %v1127 = vsub.s32 1, %v1126
        %v1128 = vrot.slane %v1119, %v1127
        %v1133 = vcombine.high %v973, %v973
        %v1135 = vunpack.c.l.s4 1983009808
        %v1136 = vunpack.c.0.s8 %v1135
        %v1137 = vlaneseq
        %v1138 = vshrl.u32 %v1137, 7
        %v1139 = vsub.s32 %v1136, %v1138
        %v1140 = vrot.slane %v973, %v1139
        %v1142 = vunpack.c.l.s4 1983009808
        %v1143 = vunpack.c.0.s8 %v1142
        %v1144 = vlaneseq
        %v1145 = vshrl.u32 %v1144, 7
        %v1146 = vsub.s32 %v1143, %v1145
        %v1147 = vrot.slane %v1133, %v1146
        %v1148 = vcombine.high %v1140, %v1140
        %v1149 = vcombine.high %v1147, %v1147
        %v1151 = vunpack.c.l.s4 1983009808
        %v1152 = vunpack.c.0.s8 %v1151
        %v1153 = vlaneseq
        %v1154 = vshrl.u32 %v1153, 7
        %v1155 = vsub.s32 %v1152, %v1154
        %v1156 = vrot.slane %v974, %v1155
        %v1161 = vsel %vm731, %v1156, 0
        %1163 = vmatprep.subr.mxu0 %v1006
        %1164 = vmatpush1.msra.mxu0 %v1005
        %1165 = vmatprep.subr.mxu0 %v1004
        %1166 = vmatpush1.msra.mxu0 %v1003
        %1167 = vmatprep.subr.mxu0 %v1002
        %1168 = vmatpush1.msra.mxu0 %v1001
        %1169 = vmatprep.subr.mxu0 %v1000
        %1170 = vmatpush1.msra.mxu0 %v999
        %1171 = vmatprep.subr.mxu0 %v998
        %1172 = vmatpush1.msra.mxu0 %v997
        %1173 = vmatprep.subr.mxu0 %v996
        %1174 = vmatpush1.msra.mxu0 %v995
        %1175 = vmatprep.subr.mxu0 %v994
        %1176 = vmatpush1.msra.mxu0 %v993
        %1177 = vmatprep.subr.mxu0 %v992
        %1178 = vmatpush1.msra.mxu0 %v991
        %1179 = vmatprep.subr.mxu0 %v990
        %1180 = vmatpush1.msra.mxu0 %v989
        %1181 = vmatprep.subr.mxu0 %v988
        %1182 = vmatpush1.msra.mxu0 %v987
        %1183 = vmatprep.subr.mxu0 %v986
        %1184 = vmatpush1.msra.mxu0 %v985
        %1185 = vmatprep.subr.mxu0 %v984
        %1186 = vmatpush1.msra.mxu0 %v983
        %1187 = vmatprep.subr.mxu0 %v982
        %1188 = vmatpush1.msra.mxu0 %v981
        %1189 = vmatprep.subr.mxu0 %v980
        %1190 = vmatpush1.msra.mxu0 %v979
        %1191 = vmatprep.subr.mxu0 %v978
        %1192 = vmatpush1.msra.mxu0 %v977
        %1193 = vmatprep.subr.mxu0 %v976
        %1194 = vmatpush1.msra.mxu0 %v975
        %1195 = vmatprep.subr.mxu0 %v1038
        %1196 = vmatpush2.msra.mxu0 %v1037
        %1197 = vmatprep.subr.mxu0 %v1036
        %1198 = vmatpush2.msra.mxu0 %v1035
        %1199 = vmatprep.subr.mxu0 %v1034
        %1200 = vmatpush2.msra.mxu0 %v1033
        %1201 = vmatprep.subr.mxu0 %v1032
        %1202 = vmatpush2.msra.mxu0 %v1031
        %1203 = vmatprep.subr.mxu0 %v1030
        %1204 = vmatpush2.msra.mxu0 %v1029
        %1205 = vmatprep.subr.mxu0 %v1028
        %1206 = vmatpush2.msra.mxu0 %v1027
        %1207 = vmatprep.subr.mxu0 %v1026
        %1208 = vmatpush2.msra.mxu0 %v1025
        %1209 = vmatprep.subr.mxu0 %v1024
        %1210 = vmatpush2.msra.mxu0 %v1023
        %1211 = vmatprep.subr.mxu0 %v1022
        %1212 = vmatpush2.msra.mxu0 %v1021
        %1213 = vmatprep.subr.mxu0 %v1020
        %1214 = vmatpush2.msra.mxu0 %v1019
        %1215 = vmatprep.subr.mxu0 %v1018
        %1216 = vmatpush2.msra.mxu0 %v1017
        %1217 = vmatprep.subr.mxu0 %v1016
        %1218 = vmatpush2.msra.mxu0 %v1015
        %1219 = vmatprep.subr.mxu0 %v1014
        %1220 = vmatpush2.msra.mxu0 %v1013
        %1221 = vmatprep.subr.mxu0 %v1012
        %1222 = vmatpush2.msra.mxu0 %v1011
        %1223 = vmatprep.subr.mxu0 %v1010
        %1224 = vmatpush2.msra.mxu0 %v1009
        %1225 = vmatprep.subr.mxu0 %v1008
        %1226 = vmatpush2.msra.mxu0 %v1007
        %1227 = vmatprep.mubr.f32.mxu0 %v1148
        %1228 = vmatmul.mubr.f32.gmra.mxu0 %v1140
        %v1229 = vpop.f32.mrf.mxu0
        %v1230 = vadd.f32 %v1124, %v1229
        %v1231 = vpop.f32.mrf.mxu0
        %v1232 = vadd.f32 %v1128, %v1231
        %1233 = vdwg.mxu0
        %1234 = vmatprep.subr.mxu0 %v1070
        %1235 = vmatpush1.msra.mxu0 %v1069
        %1236 = vmatprep.subr.mxu0 %v1068
        %1237 = vmatpush1.msra.mxu0 %v1067
        %1238 = vmatprep.subr.mxu0 %v1066
        %1239 = vmatpush1.msra.mxu0 %v1065
        %1240 = vmatprep.subr.mxu0 %v1064
        %1241 = vmatpush1.msra.mxu0 %v1063
        %1242 = vmatprep.subr.mxu0 %v1062
        %1243 = vmatpush1.msra.mxu0 %v1061
        %1244 = vmatprep.subr.mxu0 %v1060
        %1245 = vmatpush1.msra.mxu0 %v1059
        %1246 = vmatprep.subr.mxu0 %v1058
        %1247 = vmatpush1.msra.mxu0 %v1057
        %1248 = vmatprep.subr.mxu0 %v1056
        %1249 = vmatpush1.msra.mxu0 %v1055
        %1250 = vmatprep.subr.mxu0 %v1054
        %1251 = vmatpush1.msra.mxu0 %v1053
        %1252 = vmatprep.subr.mxu0 %v1052
        %1253 = vmatpush1.msra.mxu0 %v1051
        %1254 = vmatprep.subr.mxu0 %v1050
        %1255 = vmatpush1.msra.mxu0 %v1049
        %1256 = vmatprep.subr.mxu0 %v1048
        %1257 = vmatpush1.msra.mxu0 %v1047
        %1258 = vmatprep.subr.mxu0 %v1046
        %1259 = vmatpush1.msra.mxu0 %v1045
        %1260 = vmatprep.subr.mxu0 %v1044
        %1261 = vmatpush1.msra.mxu0 %v1043
        %1262 = vmatprep.subr.mxu0 %v1042
        %1263 = vmatpush1.msra.mxu0 %v1041
        %1264 = vmatprep.subr.mxu0 %v1040
        %1265 = vmatpush1.msra.mxu0 %v1039
        %1266 = vmatprep.subr.mxu0 %v1102
        %1267 = vmatpush2.msra.mxu0 %v1101
        %1268 = vmatprep.subr.mxu0 %v1100
        %1269 = vmatpush2.msra.mxu0 %v1099
        %1270 = vmatprep.subr.mxu0 %v1098
        %1271 = vmatpush2.msra.mxu0 %v1097
        %1272 = vmatprep.subr.mxu0 %v1096
        %1273 = vmatpush2.msra.mxu0 %v1095
        %1274 = vmatprep.subr.mxu0 %v1094
        %1275 = vmatpush2.msra.mxu0 %v1093
        %1276 = vmatprep.subr.mxu0 %v1092
        %1277 = vmatpush2.msra.mxu0 %v1091
        %1278 = vmatprep.subr.mxu0 %v1090
        %1279 = vmatpush2.msra.mxu0 %v1089
        %1280 = vmatprep.subr.mxu0 %v1088
        %1281 = vmatpush2.msra.mxu0 %v1087
        %1282 = vmatprep.subr.mxu0 %v1086
        %1283 = vmatpush2.msra.mxu0 %v1085
        %1284 = vmatprep.subr.mxu0 %v1084
        %1285 = vmatpush2.msra.mxu0 %v1083
        %1286 = vmatprep.subr.mxu0 %v1082
        %1287 = vmatpush2.msra.mxu0 %v1081
        %1288 = vmatprep.subr.mxu0 %v1080
        %1289 = vmatpush2.msra.mxu0 %v1079
        %1290 = vmatprep.subr.mxu0 %v1078
        %1291 = vmatpush2.msra.mxu0 %v1077
        %1292 = vmatprep.subr.mxu0 %v1076
        %1293 = vmatpush2.msra.mxu0 %v1075
        %1294 = vmatprep.subr.mxu0 %v1074
        %1295 = vmatpush2.msra.mxu0 %v1073
        %1296 = vmatprep.subr.mxu0 %v1072
        %1297 = vmatpush2.msra.mxu0 %v1071
        %1298 = vmatprep.mubr.f32.mxu0 %v1149
        %1299 = vmatmul.mubr.f32.gmra.mxu0 %v1147
        %v1300 = vpop.f32.mrf.mxu0
        %v1301 = vadd.f32 %v1230, %v1300
        %v1302 = vpop.f32.mrf.mxu0
        %v1303 = vadd.f32 %v1232, %v1302
        %1304 = vdwg.mxu0
        %1305 = vmatprep.subr.mxu0 0.0
        %1306 = vmatpush1.msra.mxu0 0.0
        %1307 = vmatprep.subr.mxu0 0.0
        %1308 = vmatpush1.msra.mxu0 0.0
        %1309 = vmatprep.subr.mxu0 0.0
        %1310 = vmatpush1.msra.mxu0 0.0
        %1311 = vmatprep.subr.mxu0 0.0
        %1312 = vmatpush1.msra.mxu0 0.0
        %1313 = vmatprep.subr.mxu0 0.0
        %1314 = vmatpush1.msra.mxu0 0.0
        %1315 = vmatprep.subr.mxu0 0.0
        %1316 = vmatpush1.msra.mxu0 0.0
        %1317 = vmatprep.subr.mxu0 0.0
        %1318 = vmatpush1.msra.mxu0 0.0
        %1319 = vmatprep.subr.mxu0 0.0
        %1320 = vmatpush1.msra.mxu0 0.0
        %1321 = vmatprep.subr.mxu0 %v1118
        %1322 = vmatpush1.msra.mxu0 %v1117
        %1323 = vmatprep.subr.mxu0 %v1116
        %1324 = vmatpush1.msra.mxu0 %v1115
        %1325 = vmatprep.subr.mxu0 %v1114
        %1326 = vmatpush1.msra.mxu0 %v1113
        %1327 = vmatprep.subr.mxu0 %v1112
        %1328 = vmatpush1.msra.mxu0 %v1111
        %1329 = vmatprep.subr.mxu0 %v1110
        %1330 = vmatpush1.msra.mxu0 %v1109
        %1331 = vmatprep.subr.mxu0 %v1108
        %1332 = vmatpush1.msra.mxu0 %v1107
        %1333 = vmatprep.subr.mxu0 %v1106
        %1334 = vmatpush1.msra.mxu0 %v1105
        %1335 = vmatprep.subr.mxu0 %v1104
        %1336 = vmatpush1.msra.mxu0 %v1103
        %1337 = vmatprep.subr.mxu0 0.0
        %1338 = vmatpush2.msra.mxu0 0.0
        %1339 = vmatprep.subr.mxu0 0.0
        %1340 = vmatpush2.msra.mxu0 0.0
        %1341 = vmatprep.subr.mxu0 0.0
        %1342 = vmatpush2.msra.mxu0 0.0
        %1343 = vmatprep.subr.mxu0 0.0
        %1344 = vmatpush2.msra.mxu0 0.0
        %1345 = vmatprep.subr.mxu0 0.0
        %1346 = vmatpush2.msra.mxu0 0.0
        %1347 = vmatprep.subr.mxu0 0.0
        %1348 = vmatpush2.msra.mxu0 0.0
        %1349 = vmatprep.subr.mxu0 0.0
        %1350 = vmatpush2.msra.mxu0 0.0
        %1351 = vmatprep.subr.mxu0 0.0
        %1352 = vmatpush2.msra.mxu0 0.0
        %1353 = vmatprep.subr.mxu0 0.0
        %1354 = vmatpush2.msra.mxu0 0.0
        %1355 = vmatprep.subr.mxu0 0.0
        %1356 = vmatpush2.msra.mxu0 0.0
        %1357 = vmatprep.subr.mxu0 0.0
        %1358 = vmatpush2.msra.mxu0 0.0
        %1359 = vmatprep.subr.mxu0 0.0
        %1360 = vmatpush2.msra.mxu0 0.0
        %1361 = vmatprep.subr.mxu0 0.0
        %1362 = vmatpush2.msra.mxu0 0.0
        %1363 = vmatprep.subr.mxu0 0.0
        %1364 = vmatpush2.msra.mxu0 0.0
        %1365 = vmatprep.subr.mxu0 0.0
        %1366 = vmatpush2.msra.mxu0 0.0
        %1367 = vmatprep.subr.mxu0 0.0
        %1368 = vmatpush2.msra.mxu0 0.0
        %1369 = vmatprep.mubr.f32.mxu0 0.0
        %1370 = vmatmul.mubr.f32.gmra.mxu0 %v1161
        %v1371 = vpop.f32.mrf.mxu0
        %v1372 = vadd.f32 %v1301, %v1371
        %v1373 = vpop.f32.mrf.mxu0
        %v1374 = vadd.f32 %v1303, %v1373
        %1375 = vdwg.mxu0
        %vm1376 = vcmp.gt.f32.partialorder %v1372, 0.0
        %vm1377 = vcmp.gt.f32.partialorder %v1374, 0.0
        %v1378 = vmin.f32 %v1372, 0.0
        %v1379 = vmin.f32 %v1374, 0.0
        %v1380 = vmul.f32 %v1378, 1.442695
        %v1381 = vpow.pop %v1380
        %v1382 = vmul.f32 %v1379, 1.442695
        %v1383 = vpow.pop %v1382
        %v1384 = vsub.f32 %v1381, 1.0
        %v1385 = vsub.f32 %v1383, 1.0
        %v1386 = vsel %vm1376, %v1372, %v1384
        %v1387 = vsel %vm1377, %v1374, %v1385
        %v1390 = vcombine.low %v1386, %v1387
        %v1392 = vunpack.c.l.s4 1983009808
        %v1393 = vunpack.c.0.s8 %v1392
        %v1394 = vlaneseq
        %v1395 = vshrl.u32 %v1394, 7
        %v1396 = vsub.s32 %v1393, %v1395
        %v1397 = vrot.slane %v1390, %v1396
        %s1399 = scalar_lea.vmem %s378, 8 [#allocation12]
        %1400 = vst [vmem:[%s1399] sm:$0xf] %v1397
        %1401 = vst [vmem:[%s1399 + $0x4] sm:$0xf] %v1397
        %s1402 = sand.u32 %s190, 1
        %s1403 = scalar_lea.sflag [#allocation6], %s1402
        %s1404 = sand.u32 %s190, 1
        %s1405 = smul.addr %s1404, 16
        %s1406 = scalar_lea.vmem [#allocation12], %s1405
        // Predicated region
        $region57: #{tpu_custom_call.1} parent=39 // pred_check
          %p1407 = pneg %p200
        $region58: #{tpu_custom_call.1} parent=39 // pred_check_branch
          %1409 = sbr.rel (%p1407) target = $region60
        $region59: #{tpu_custom_call.1} parent=39 // pred_region
          %s1410 = smul.u32 2, %s31
          %s1412 = ssub.s32 256, 256
          %1413 = vsyncadd %s1403, %s1412
          %s1414 = smul.addr %s1410, 4
          %s1415 = smul.addr %s30, 8
          %s1416 = sadd.s32 %s1414, %s1415
          %s1417 = smul.addr %s1416, 32
          %s1418 = scalar_lea.hbm %s5, %s1417
          %s1419 = sshll.u32 %s1406, 4
          %s1420 = int_to_ptr.vmem [resolvable:$true] %s1419
          %1425 = dma.vmem_to_hbm [thread:$0]  %s1420, 256, %s1418, %s1403, 128, 128, 8
        $region60: #{tpu_custom_call.1} parent=39 // pred_fallthru
          _
      $region40: #{tpu_custom_call.1} parent=5 // pred_fallthru
        _
      %p1426 = scmp.le.s32.totalorder 2, %s21
      // Predicated region
      $region61: #{tpu_custom_call.1} parent=5 // pred_check
        %p1427 = pneg %p1426
      $region62: #{tpu_custom_call.1} parent=5 // pred_check_branch
        %1429 = sbr.rel (%p1427) target = $region64
      $region63: #{tpu_custom_call.1} parent=5 // pred_region
        %s1430 = ssub.s32 %s21, 2
        // Predicated region
        $region65: #{tpu_custom_call.1} parent=63 // pred_check
          %p1431 = pneg %p206
        $region66: #{tpu_custom_call.1} parent=63 // pred_check_branch
          %1433 = sbr.rel (%p1431) target = $region68
        $region67: #{tpu_custom_call.1} parent=63 // pred_region
          %s1434 = sand.u32 %s191, 1
          %s1435 = scalar_lea.sflag [#allocation6], %s1434
          %s1436 = sand.u32 %s191, 1
          %s1437 = smul.addr %s1436, 16
          %s1438 = scalar_lea.vmem [#allocation12], %s1437
          %1439 = dma.done %s1435, 256
        $region68: #{tpu_custom_call.1} parent=63 // pred_fallthru
          _
      $region64: #{tpu_custom_call.1} parent=5 // pred_fallthru
        _
    $region6: #{tpu_custom_call.1} parent=1 // loop_footer
      %s25 = sadd.s32 1, %s21
    $region7: #{tpu_custom_call.1} parent=1 // loop_footer_branch
      %20 = sbr.rel target = $region3
    $region8: #{tpu_custom_call.1} parent=1 // loop_exit
      _
    %1440 = vsyncpa [#allocation5], 1
    %s1441 = scalar_lea.sflag [#allocation5], 1
    %1442 = vsyncpa %s1441, 1
    %1443 = vsyncpa [#allocation8], 1
    %s1444 = scalar_lea.sflag [#allocation8], 1
    %1445 = vsyncpa %s1444, 1
    %1446 = vsyncpa [#allocation11], 1
    %1447 = vsyncpa [#allocation6], 1
    %s1448 = scalar_lea.sflag [#allocation6], 1
    %1449 = vsyncpa %s1448, 1

</llo_original>
